<compile_context>
chip_gen: v6e
topology: v6e:2x2x1
jax: 0.10.0
libtpu: 0.0.40
codegen_flags: <defaults>
</compile_context>

<pallas_src>
import functools

import jax
import jax.numpy as jnp
from jax.experimental import pallas as pl
from jax.experimental.pallas import tpu as pltpu

MATMUL_DTYPE = jnp.bfloat16   # MXU operand dtype; accumulation is always f32.
# NOTE: bf16 operands can in principle flip an argmax between near-tied logits
#       relative to an f32 PyTorch reference (acknowledged correctness caveat).
RMSNORM_EPS = 1e-6            # TODO(synk): confirm eps matches SimpleRMSNorm.


# ----------------------------------------------------------------------------
# Small helpers
# ----------------------------------------------------------------------------

def _vmem_limit_bytes():
    """~3/4 of physical VMEM (≈48 MiB on v7x, ≈96 MiB on v5e/v6e), ≤100 MiB."""
    try:
        cap = pltpu.get_tpu_info().vmem_capacity_bytes
        return min(int(cap * 3 // 4), 100 * 1024 * 1024)
    except Exception:
        return 48 * 1024 * 1024      # safe on every generation


def _const_spec(shape, index_map):
    """BlockSpec for grid-constant weights/biases: single-buffered (they never
    change across the grid), halving weight VMEM vs. default double-buffering.
    Falls back to a plain spec if pipeline_mode/Buffered(1) is unavailable."""
    try:
        return pl.BlockSpec(shape, index_map, pipeline_mode=pl.Buffered(1))
    except Exception:
        return pl.BlockSpec(shape, index_map)


def _rmsnorm(x, w):
    """f32 RMSNorm: x * rsqrt(mean(x^2) + eps) * w."""
    ms = jnp.mean(x * x, axis=-1, keepdims=True)
    return x * jax.lax.rsqrt(ms + RMSNORM_EPS) * w


def _mm(x, w_t):
    """x [M,K] f32 @ pre-transposed bf16 weight w_t [K,N] -> f32 [M,N] (MXU)."""
    return jnp.dot(x.astype(w_t.dtype), w_t, preferred_element_type=jnp.float32)


# ----------------------------------------------------------------------------
# Fused per-layer kernel (one grid step per batch element)
# ----------------------------------------------------------------------------

def _layer_kernel(x_ref, n1w_ref, wqkv_ref, bqkv_ref, wo_ref, bo_ref,
                  n2w_ref, wgb_ref, bgb_ref, w1_ref, b1_ref, w2_ref, b2_ref,
                  o_ref, *, n_heads, head_dim):
    x = x_ref[...]                                      # [T, D] f32 (one batch elem)
    d_model = n_heads * head_dim

    # ---- attention: rmsnorm -> fused QKV proj -> per-head SDPA -> out proj ----
    h = _rmsnorm(x, n1w_ref[...])
    qkv = _mm(h, wqkv_ref[...]) + bqkv_ref[...]         # [T, 3D]  one wide MXU dot
    scale = 1.0 / float(head_dim) ** 0.5
    q = (qkv[:, :d_model] * scale).astype(MATMUL_DTYPE)    # scale folded into q
    k = qkv[:, d_model:2 * d_model].astype(MATMUL_DTYPE)
    v = qkv[:, 2 * d_model:].astype(MATMUL_DTYPE)

    # True per-head contraction over head_dim (bf16 operands, f32 accumulation);
    # q.k^T via dot_general — no materialized transpose, no column-mask trick.
    # TODO(synk): flash-style tile the key/value axis for long sequences on v7x
    #             (bounds the [T,T] score VMEM independent of T).
    heads = []
    for hh in range(n_heads):
        sl = slice(hh * head_dim, (hh + 1) * head_dim)
        q_h, k_h, v_h = q[:, sl], k[:, sl], v[:, sl]
        s = jax.lax.dot_general(q_h, k_h, (((1,), (1,)), ((), ())),
                                preferred_element_type=jnp.float32)   # [T, T]
        s = s - jnp.max(s, axis=-1, keepdims=True)                    # f32 softmax
        p = jnp.exp(s)
        p = p * pl.reciprocal(jnp.sum(p, axis=-1, keepdims=True), approx=True)
        heads.append(jnp.dot(p.astype(MATMUL_DTYPE), v_h,
                             preferred_element_type=jnp.float32))     # [T, Dh]
    attn = jnp.concatenate(heads, axis=-1)               # [T, D]
    x = x + _mm(attn, wo_ref[...]) + bo_ref[...]         # residual; dropout1 = id

    # ---- FFN: rmsnorm -> FiLM (fused gamma|beta proj) -> Linear/GELU/Linear ----
    h = _rmsnorm(x, n2w_ref[...])
    gb = _mm(h, wgb_ref[...]) + bgb_ref[...]             # [T, 2D]  one wide MXU dot
    # SimpleFiLM(x_norm, cond=x_norm): x * gamma(cond) + beta(cond)
    # TODO(synk): verify SimpleFiLM conditions on the post-norm activation.
    h = h * gb[:, :d_model] + gb[:, d_model:]
    f = _mm(h, w1_ref[...]) + b1_ref[...]
    # TODO(synk): nn.GELU() default is exact erf; tanh approximation used because
    #             erf is not guaranteed to lower on Mosaic.
    f = jax.nn.gelu(f, approximate=True)
    y = _mm(f, w2_ref[...]) + b2_ref[...]
    o_ref[...] = x + y                                   # residual; dropout2 = id


def transformer_layer(x, lp, *, batch, seq_len, n_heads, head_dim):
    """One fused pallas_call per layer: attention + FiLM/FFN share the x fetch,
    so the activation makes a single HBM round-trip per layer."""
    M, D = x.shape
    T = seq_len
    F = lp['w1'].shape[1]

    kernel = functools.partial(_layer_kernel, n_heads=n_heads, head_dim=head_dim)
    # TODO(synk): for short sequences on v6e/v7x, fold several batch elements
    #             per grid step so the MXU M dimension reaches >= 256.
    return pl.pallas_call(
        kernel,
        grid=(batch,),
        in_specs=[
            pl.BlockSpec((T, D), lambda b: (b, 0)),        # activations of batch b
            _const_spec((1, D), lambda b: (0, 0)),         # norm1 weight
            _const_spec((D, 3 * D), lambda b: (0, 0)),     # fused Wqkv^T (bf16)
            _const_spec((1, 3 * D), lambda b: (0, 0)),     # fused bqkv
            _const_spec((D, D), lambda b: (0, 0)),         # Wo^T
            _const_spec((1, D), lambda b: (0, 0)),         # bo
            _const_spec((1, D), lambda b: (0, 0)),         # norm2 weight
            _const_spec((D, 2 * D), lambda b: (0, 0)),     # fused FiLM [gamma|beta] W^T
            _const_spec((1, 2 * D), lambda b: (0, 0)),     # fused FiLM bias
            _const_spec((D, F), lambda b: (0, 0)),         # FFN W1^T
            _const_spec((1, F), lambda b: (0, 0)),         # b1
            _const_spec((F, D), lambda b: (0, 0)),         # FFN W2^T
            _const_spec((1, D), lambda b: (0, 0)),         # b2
        ],
        out_specs=pl.BlockSpec((T, D), lambda b: (b, 0)),
        out_shape=jax.ShapeDtypeStruct((M, D), jnp.float32),
        compiler_params=pltpu.CompilerParams(
            dimension_semantics=("parallel",),
            vmem_limit_bytes=_vmem_limit_bytes()),
    )(x, lp['norm1_w'], lp['wqkv'], lp['bqkv'], lp['wo'], lp['bo'],
      lp['norm2_w'], lp['wgb'], lp['bgb'], lp['w1'], lp['b1'],
      lp['w2'], lp['b2'])


# ----------------------------------------------------------------------------
# Fused final norm + single stacked projection + per-codebook argmax
# ----------------------------------------------------------------------------

def _final_proj_kernel(x_ref, nw_ref, w_ref, b_ref, o_ref, *, n_cb, vocab):
    h = _rmsnorm(x_ref[...], nw_ref[...])
    logits = _mm(h, w_ref[...]) + b_ref[...]             # [tm, n_cb*V], one wide dot
    # temperature == 1.0 fixed in the ONNX module; a positive temperature does
    # not change the argmax, so it is folded away.
    col = jax.lax.broadcasted_iota(jnp.int32, (logits.shape[0], vocab), 1)
    big = jnp.iinfo(jnp.int32).max
    for cb in range(n_cb):
        lg = logits[:, cb * vocab:(cb + 1) * vocab]
        mx = jnp.max(lg, axis=-1, keepdims=True)
        cand = jnp.where(lg == mx, col, big)
        # first-max index (matches torch.argmax tie-breaking)
        o_ref[:, cb:cb + 1] = jnp.min(cand, axis=-1, keepdims=True)


def final_proj_argmax(x, norm_w, out_w, out_b, *, n_cb):
    """Single fused epilogue: rmsnorm once, one [M,D]@[D,n_cb*V] matmul, argmax
    per V-sized column segment. Output written once as int32 [M, n_cb]."""
    M, D = x.shape
    NV = out_w.shape[1]
    V = NV // n_cb
    tm = 256 if (M > 256 and M % 256 == 0) else M        # row-block tiling

    kernel = functools.partial(_final_proj_kernel, n_cb=n_cb, vocab=V)
    return pl.pallas_call(
        kernel,
        grid=(M // tm,),
        in_specs=[
            pl.BlockSpec((tm, D), lambda i: (i, 0)),       # activations row block
            _const_spec((1, D), lambda i: (0, 0)),         # final norm weight
            _const_spec((D, NV), lambda i: (0, 0)),        # stacked W^T (all codebooks)
            _const_spec((1, NV), lambda i: (0, 0)),        # stacked bias
        ],
        out_specs=pl.BlockSpec((tm, n_cb), lambda i: (i, 0)),
        out_shape=jax.ShapeDtypeStruct((M, n_cb), jnp.int32),
        compiler_params=pltpu.CompilerParams(
            dimension_semantics=("parallel",),
            vmem_limit_bytes=_vmem_limit_bytes()),
    )(x, norm_w, out_w, out_b)


# ----------------------------------------------------------------------------
# Model wrapper (glue: embedding gather, residual plumbing, mask handling)
# ----------------------------------------------------------------------------

def vampnet_forward(params, codes, mask=None, temperature=1.0):
    """codes: int32 [B, n_codebooks, T]  ->  int32 [B, n_codebooks, T]."""
    del temperature  # fixed 1.0; argmax invariant (see _final_proj_kernel)
    B, C, T = codes.shape
    n_cb = params['n_codebooks']
    D = params['d_model']
    H = params['n_heads']
    Dh = D // H

    # Codebook embedding: one vectorized gather over a flattened table, summed
    # over codebooks (glue; gather kept in JAX).
    flat_emb = params['embedding_flat']                       # [n_cb*(vocab+1), D]
    rows_per_cb = flat_emb.shape[0] // n_cb
    idx = codes + (jnp.arange(n_cb, dtype=codes.dtype) * rows_per_cb)[None, :, None]
    x = jnp.take(flat_emb, idx, axis=0).sum(axis=1)           # [B, T, D]
    x = x + params['pos_encoding'][:, :T, :]
    x = x.reshape(B * T, D).astype(jnp.float32)

    for lp in params['layers']:
        x = transformer_layer(x, lp, batch=B, seq_len=T, n_heads=H, head_dim=Dh)

    preds = final_proj_argmax(x, params['final_norm_w'], params['out_w'],
                              params['out_b'], n_cb=n_cb)     # [B*T, n_cb]
    predictions = preds.reshape(B, T, n_cb).transpose(0, 2, 1)  # [B, n_cb, T]

    if mask is not None:
        # torch.where(mask.bool(), predictions, codes) — matches the spec module.
        predictions = jnp.where(mask.astype(bool), predictions, codes)
    return predictions


# ----------------------------------------------------------------------------
# Parameter construction (PyTorch layout) + one-time packing to kernel layout
# ----------------------------------------------------------------------------

def init_params(key, *, n_codebooks=4, vocab_size=64, d_model=64,
                n_heads=4, n_layers=2, max_pos=32):
    """Deterministic synthetic initialization in PyTorch layout (nn.Linear = [N,K])."""
    std = 0.02
    keys = iter(jax.random.split(key, 8 + 8 * n_layers + 2 * n_codebooks))

    def nrm(shape):
        return std * jax.random.normal(next(keys), shape, dtype=jnp.float32)

    params = {
        'n_codebooks': n_codebooks,
        'd_model': d_model,
        'n_heads': n_heads,
        'embedding': nrm((n_codebooks, vocab_size + 1, d_model)),  # +1 mask token
        'pos_encoding': nrm((1, max_pos, d_model)),
        'final_norm_w': jnp.ones((d_model,), jnp.float32),
        'layers': [],
        'out_w': [nrm((vocab_size, d_model)) for _ in range(n_codebooks)],
        'out_b': [jnp.zeros((vocab_size,), jnp.float32) for _ in range(n_codebooks)],
    }
    for _ in range(n_layers):
        params['layers'].append({
            'norm1_w': jnp.ones((d_model,), jnp.float32),
            'attn_in_w': nrm((3 * d_model, d_model)),
            'attn_in_b': jnp.zeros((3 * d_model,), jnp.float32),
            'attn_out_w': nrm((d_model, d_model)),
            'attn_out_b': jnp.zeros((d_model,), jnp.float32),
            'norm2_w': jnp.ones((d_model,), jnp.float32),
            'film_gamma_w': nrm((d_model, d_model)),
            'film_gamma_b': jnp.ones((d_model,), jnp.float32),
            'film_beta_w': nrm((d_model, d_model)),
            'film_beta_b': jnp.zeros((d_model,), jnp.float32),
            'ffn_w1': nrm((4 * d_model, d_model)),
            'ffn_b1': jnp.zeros((4 * d_model,), jnp.float32),
            'ffn_w2': nrm((d_model, 4 * d_model)),
            'ffn_b2': jnp.zeros((d_model,), jnp.float32),
        })
    return params


def pack_params(p):
    """One-time conversion to kernel layout: pre-transposed [K,N] bf16 weights
    (QKV fused to [D,3D], FiLM gamma|beta fused to [D,2D], codebook heads stacked
    to [D,n_cb*V]), [1,N] f32 biases/norms, flattened embedding table.
    NOTE: production d_model / head_dim should be multiples of 128 for full
    lane / MXU utilization (toy D=64 is intentionally small)."""
    D = p['d_model']

    def w_t(w):
        return jnp.asarray(w, jnp.float32).T.astype(MATMUL_DTYPE)

    def row(b):
        return jnp.asarray(b, jnp.float32).reshape(1, -1)

    packed = {
        'n_codebooks': p['n_codebooks'],
        'd_model': D,
        'n_heads': p['n_heads'],
        'embedding_flat': jnp.asarray(p['embedding'], jnp.float32).reshape(-1, D),
        'pos_encoding': jnp.asarray(p['pos_encoding'], jnp.float32),
        'final_norm_w': row(p['final_norm_w']),
        'out_w': jnp.concatenate([w_t(w) for w in p['out_w']], axis=1),  # [D, n_cb*V]
        'out_b': jnp.concatenate([row(b) for b in p['out_b']], axis=1),  # [1, n_cb*V]
        'layers': [],
    }
    for lp in p['layers']:
        packed['layers'].append({
            'norm1_w': row(lp['norm1_w']),
            'wqkv': w_t(lp['attn_in_w']),                    # [D, 3D] (Q|K|V columns)
            'bqkv': row(lp['attn_in_b']),                    # [1, 3D]
            'wo': w_t(lp['attn_out_w']), 'bo': row(lp['attn_out_b']),
            'norm2_w': row(lp['norm2_w']),
            'wgb': jnp.concatenate([w_t(lp['film_gamma_w']),
                                    w_t(lp['film_beta_w'])], axis=1),   # [D, 2D]
            'bgb': jnp.concatenate([row(lp['film_gamma_b']),
                                    row(lp['film_beta_b'])], axis=1),   # [1, 2D]
            'w1': w_t(lp['ffn_w1']), 'b1': row(lp['ffn_b1']),
            'w2': w_t(lp['ffn_w2']), 'b2': row(lp['ffn_b2']),
        })
    return packed


if __name__ == "__main__":
    key = jax.random.PRNGKey(0)
    pkey, ckey = jax.random.split(key)

    # Small, shape-consistent configuration of the module.
    n_cb, vocab, d_model, n_heads, n_layers = 4, 64, 64, 4, 2
    B, T = 2, 8

    raw = init_params(pkey, n_codebooks=n_cb, vocab_size=vocab,
                      d_model=d_model, n_heads=n_heads, n_layers=n_layers,
                      max_pos=32)
    params = pack_params(raw)

    # codes may include the mask token (== vocab) just like VampNet.
    codes = jax.random.randint(ckey, (B, n_cb, T), 0, vocab + 1, dtype=jnp.int32)

    # params are closed over (static config stays Python-int); jit fuses the glue.
    fwd = jax.jit(lambda c: vampnet_forward(params, c, mask=None, temperature=1.0))
    out = jax.block_until_ready(fwd(codes))
    assert out.shape == (B, n_cb, T) and out.dtype == jnp.int32
    print("KERNEL_OK")
</pallas_src>

<mosaic_0001>
module attributes {stable_mosaic.version = 11 : i64} {
  func.func @_final_proj_kernel(%arg0: i32, %arg1: memref<16x64xf32, #tpu.memory_space<vmem>>, %arg2: memref<1x64xf32, #tpu.memory_space<vmem>>, %arg3: memref<64x256xbf16, #tpu.memory_space<vmem>>, %arg4: memref<1x256xf32, #tpu.memory_space<vmem>>, %arg5: memref<16x4xi32, #tpu.memory_space<vmem>>) attributes {dimension_semantics = [#tpu.dimension_semantics<parallel>], iteration_bounds = array<i64: 1>, scalar_prefetch = 0 : i64, scratch_operands = 0 : i64, tpu.core_type = #tpu.core_type<tc>, window_params = [{transform_indices = @transform_0, window_bounds = array<i64: 16, 64>}, {pipeline_mode = #tpu.pipeline_mode<synchronous>, transform_indices = @transform_1, window_bounds = array<i64: 1, 64>}, {pipeline_mode = #tpu.pipeline_mode<synchronous>, transform_indices = @transform_2, window_bounds = array<i64: 64, 256>}, {pipeline_mode = #tpu.pipeline_mode<synchronous>, transform_indices = @transform_3, window_bounds = array<i64: 1, 256>}, {transform_indices = @transform_4, window_bounds = array<i64: 16, 4>}]} {
    %c0 = arith.constant 0 : index
    %c0_0 = arith.constant 0 : index
    %0 = vector.load %arg1[%c0, %c0_0] : memref<16x64xf32, #tpu.memory_space<vmem>>, vector<16x64xf32>
    %c0_1 = arith.constant 0 : index
    %c0_2 = arith.constant 0 : index
    %1 = vector.load %arg2[%c0_1, %c0_2] : memref<1x64xf32, #tpu.memory_space<vmem>>, vector<1x64xf32>
    %2 = arith.mulf %0, %0 : vector<16x64xf32>
    %cst = arith.constant dense<0.000000e+00> : vector<16xf32>
    %3 = vector.multi_reduction <add>, %2, %cst [1] : vector<16x64xf32> to vector<16xf32>
    %4 = vector.shape_cast %3 : vector<16xf32> to vector<16x1xf32>
    %cst_3 = arith.constant 6.400000e+01 : f32
    %5 = vector.broadcast %cst_3 : f32 to vector<16x1xf32>
    %6 = arith.divf %4, %5 : vector<16x1xf32>
    %cst_4 = arith.constant 9.99999997E-7 : f32
    %7 = vector.broadcast %cst_4 : f32 to vector<16x1xf32>
    %8 = arith.addf %6, %7 : vector<16x1xf32>
    %9 = math.rsqrt %8 : vector<16x1xf32>
    %10 = vector.broadcast %9 : vector<16x1xf32> to vector<16x64xf32>
    %11 = arith.mulf %0, %10 : vector<16x64xf32>
    %12 = vector.broadcast %1 : vector<1x64xf32> to vector<16x64xf32>
    %13 = arith.mulf %11, %12 : vector<16x64xf32>
    %c0_5 = arith.constant 0 : index
    %c0_6 = arith.constant 0 : index
    %14 = vector.load %arg3[%c0_5, %c0_6] : memref<64x256xbf16, #tpu.memory_space<vmem>>, vector<64x256xbf16>
    %15 = arith.truncf %13 : vector<16x64xf32> to vector<16x64xbf16>
    %cst_7 = arith.constant dense<0.000000e+00> : vector<16x256xf32>
    %16 = tpu.matmul %15, %14, %cst_7 {dimension_numbers = #tpu.dot_dimension_numbers<[1], [0], [0], [1], [0, 0, 1, 1], [], []>} : vector<16x64xbf16>, vector<64x256xbf16>, vector<16x256xf32> -> vector<16x256xf32>
    %c0_8 = arith.constant 0 : index
    %c0_9 = arith.constant 0 : index
    %17 = vector.load %arg4[%c0_8, %c0_9] : memref<1x256xf32, #tpu.memory_space<vmem>>, vector<1x256xf32>
    %18 = vector.broadcast %17 : vector<1x256xf32> to vector<16x256xf32>
    %19 = arith.addf %16, %18 : vector<16x256xf32>
    %20 = tpu.iota {dimensions = array<i32: 1>} : vector<16x64xi32>
    %21 = vector.extract_strided_slice %19 {offsets = [0, 0], sizes = [16, 64], strides = [1, 1]} : vector<16x256xf32> to vector<16x64xf32>
    %cst_10 = arith.constant dense<0xFF800000> : vector<16xf32>
    %22 = vector.multi_reduction <maximumf>, %21, %cst_10 [1] : vector<16x64xf32> to vector<16xf32>
    %23 = vector.shape_cast %22 : vector<16xf32> to vector<16x1xf32>
    %24 = vector.broadcast %23 : vector<16x1xf32> to vector<16x64xf32>
    %25 = arith.cmpf oeq, %21, %24 : vector<16x64xf32>
    %c2147483647_i32 = arith.constant 2147483647 : i32
    %26 = vector.broadcast %c2147483647_i32 : i32 to vector<16x64xi32>
    %27 = arith.select %25, %20, %26 : vector<16x64xi1>, vector<16x64xi32>
    %cst_11 = arith.constant dense<2147483647> : vector<16xi32>
    %28 = vector.multi_reduction <minsi>, %27, %cst_11 [1] : vector<16x64xi32> to vector<16xi32>
    %29 = vector.shape_cast %28 : vector<16xi32> to vector<16x1xi32>
    %c0_12 = arith.constant 0 : index
    %c0_13 = arith.constant 0 : index
    %30 = vector.load %arg5[%c0_12, %c0_13] : memref<16x4xi32, #tpu.memory_space<vmem>>, vector<16x1xi32>
    tpu.vector_store %arg5[%c0_12, %c0_13], %29 {strides = array<i32>} : memref<16x4xi32, #tpu.memory_space<vmem>>, vector<16x1xi32>,
    %31 = vector.extract_strided_slice %19 {offsets = [0, 64], sizes = [16, 64], strides = [1, 1]} : vector<16x256xf32> to vector<16x64xf32>
    %cst_14 = arith.constant dense<0xFF800000> : vector<16xf32>
    %32 = vector.multi_reduction <maximumf>, %31, %cst_14 [1] : vector<16x64xf32> to vector<16xf32>
    %33 = vector.shape_cast %32 : vector<16xf32> to vector<16x1xf32>
    %34 = vector.broadcast %33 : vector<16x1xf32> to vector<16x64xf32>
    %35 = arith.cmpf oeq, %31, %34 : vector<16x64xf32>
    %c2147483647_i32_15 = arith.constant 2147483647 : i32
    %36 = vector.broadcast %c2147483647_i32_15 : i32 to vector<16x64xi32>
    %37 = arith.select %35, %20, %36 : vector<16x64xi1>, vector<16x64xi32>
    %cst_16 = arith.constant dense<2147483647> : vector<16xi32>
    %38 = vector.multi_reduction <minsi>, %37, %cst_16 [1] : vector<16x64xi32> to vector<16xi32>
    %39 = vector.shape_cast %38 : vector<16xi32> to vector<16x1xi32>
    %c0_17 = arith.constant 0 : index
    %c1 = arith.constant 1 : index
    %40 = vector.load %arg5[%c0_17, %c1] : memref<16x4xi32, #tpu.memory_space<vmem>>, vector<16x1xi32>
    tpu.vector_store %arg5[%c0_17, %c1], %39 {strides = array<i32>} : memref<16x4xi32, #tpu.memory_space<vmem>>, vector<16x1xi32>,
    %41 = vector.extract_strided_slice %19 {offsets = [0, 128], sizes = [16, 64], strides = [1, 1]} : vector<16x256xf32> to vector<16x64xf32>
    %cst_18 = arith.constant dense<0xFF800000> : vector<16xf32>
    %42 = vector.multi_reduction <maximumf>, %41, %cst_18 [1] : vector<16x64xf32> to vector<16xf32>
    %43 = vector.shape_cast %42 : vector<16xf32> to vector<16x1xf32>
    %44 = vector.broadcast %43 : vector<16x1xf32> to vector<16x64xf32>
    %45 = arith.cmpf oeq, %41, %44 : vector<16x64xf32>
    %c2147483647_i32_19 = arith.constant 2147483647 : i32
    %46 = vector.broadcast %c2147483647_i32_19 : i32 to vector<16x64xi32>
    %47 = arith.select %45, %20, %46 : vector<16x64xi1>, vector<16x64xi32>
    %cst_20 = arith.constant dense<2147483647> : vector<16xi32>
    %48 = vector.multi_reduction <minsi>, %47, %cst_20 [1] : vector<16x64xi32> to vector<16xi32>
    %49 = vector.shape_cast %48 : vector<16xi32> to vector<16x1xi32>
    %c0_21 = arith.constant 0 : index
    %c2 = arith.constant 2 : index
    %50 = vector.load %arg5[%c0_21, %c2] : memref<16x4xi32, #tpu.memory_space<vmem>>, vector<16x1xi32>
    tpu.vector_store %arg5[%c0_21, %c2], %49 {strides = array<i32>} : memref<16x4xi32, #tpu.memory_space<vmem>>, vector<16x1xi32>,
    %51 = vector.extract_strided_slice %19 {offsets = [0, 192], sizes = [16, 64], strides = [1, 1]} : vector<16x256xf32> to vector<16x64xf32>
    %cst_22 = arith.constant dense<0xFF800000> : vector<16xf32>
    %52 = vector.multi_reduction <maximumf>, %51, %cst_22 [1] : vector<16x64xf32> to vector<16xf32>
    %53 = vector.shape_cast %52 : vector<16xf32> to vector<16x1xf32>
    %54 = vector.broadcast %53 : vector<16x1xf32> to vector<16x64xf32>
    %55 = arith.cmpf oeq, %51, %54 : vector<16x64xf32>
    %c2147483647_i32_23 = arith.constant 2147483647 : i32
    %56 = vector.broadcast %c2147483647_i32_23 : i32 to vector<16x64xi32>
    %57 = arith.select %55, %20, %56 : vector<16x64xi1>, vector<16x64xi32>
    %cst_24 = arith.constant dense<2147483647> : vector<16xi32>
    %58 = vector.multi_reduction <minsi>, %57, %cst_24 [1] : vector<16x64xi32> to vector<16xi32>
    %59 = vector.shape_cast %58 : vector<16xi32> to vector<16x1xi32>
    %c0_25 = arith.constant 0 : index
    %c3 = arith.constant 3 : index
    %60 = vector.load %arg5[%c0_25, %c3] : memref<16x4xi32, #tpu.memory_space<vmem>>, vector<16x1xi32>
    tpu.vector_store %arg5[%c0_25, %c3], %59 {strides = array<i32>} : memref<16x4xi32, #tpu.memory_space<vmem>>, vector<16x1xi32>,
    return
  }
  func.func @transform_0(%arg0: i32) -> (i32, i32) {
    %c0_i32 = arith.constant 0 : i32
    %c0_i32_0 = arith.constant 0 : i32
    return %arg0, %c0_i32 : i32, i32
  }
  func.func @transform_1(%arg0: i32) -> (i32, i32) {
    %c0_i32 = arith.constant 0 : i32
    %c0_i32_0 = arith.constant 0 : i32
    %c0_i32_1 = arith.constant 0 : i32
    return %c0_i32, %c0_i32_0 : i32, i32
  }
  func.func @transform_2(%arg0: i32) -> (i32, i32) {
    %c0_i32 = arith.constant 0 : i32
    %c0_i32_0 = arith.constant 0 : i32
    %c0_i32_1 = arith.constant 0 : i32
    return %c0_i32, %c0_i32_0 : i32, i32
  }
  func.func @transform_3(%arg0: i32) -> (i32, i32) {
    %c0_i32 = arith.constant 0 : i32
    %c0_i32_0 = arith.constant 0 : i32
    %c0_i32_1 = arith.constant 0 : i32
    return %c0_i32, %c0_i32_0 : i32, i32
  }
  func.func @transform_4(%arg0: i32) -> (i32, i32) {
    %c0_i32 = arith.constant 0 : i32
    %c0_i32_0 = arith.constant 0 : i32
    return %arg0, %c0_i32 : i32, i32
  }
}

module attributes {stable_mosaic.version = 11 : i64} {
  func.func @_layer_kernel(%arg0: i32, %arg1: memref<8x64xf32, #tpu.memory_space<vmem>>, %arg2: memref<1x64xf32, #tpu.memory_space<vmem>>, %arg3: memref<64x192xbf16, #tpu.memory_space<vmem>>, %arg4: memref<1x192xf32, #tpu.memory_space<vmem>>, %arg5: memref<64x64xbf16, #tpu.memory_space<vmem>>, %arg6: memref<1x64xf32, #tpu.memory_space<vmem>>, %arg7: memref<1x64xf32, #tpu.memory_space<vmem>>, %arg8: memref<64x128xbf16, #tpu.memory_space<vmem>>, %arg9: memref<1x128xf32, #tpu.memory_space<vmem>>, %arg10: memref<64x256xbf16, #tpu.memory_space<vmem>>, %arg11: memref<1x256xf32, #tpu.memory_space<vmem>>, %arg12: memref<256x64xbf16, #tpu.memory_space<vmem>>, %arg13: memref<1x64xf32, #tpu.memory_space<vmem>>, %arg14: memref<8x64xf32, #tpu.memory_space<vmem>>) attributes {dimension_semantics = [#tpu.dimension_semantics<parallel>], iteration_bounds = array<i64: 2>, scalar_prefetch = 0 : i64, scratch_operands = 0 : i64, tpu.core_type = #tpu.core_type<tc>, window_params = [{transform_indices = @transform_0, window_bounds = array<i64: 8, 64>}, {pipeline_mode = #tpu.pipeline_mode<synchronous>, transform_indices = @transform_1, window_bounds = array<i64: 1, 64>}, {pipeline_mode = #tpu.pipeline_mode<synchronous>, transform_indices = @transform_2, window_bounds = array<i64: 64, 192>}, {pipeline_mode = #tpu.pipeline_mode<synchronous>, transform_indices = @transform_3, window_bounds = array<i64: 1, 192>}, {pipeline_mode = #tpu.pipeline_mode<synchronous>, transform_indices = @transform_4, window_bounds = array<i64: 64, 64>}, {pipeline_mode = #tpu.pipeline_mode<synchronous>, transform_indices = @transform_5, window_bounds = array<i64: 1, 64>}, {pipeline_mode = #tpu.pipeline_mode<synchronous>, transform_indices = @transform_6, window_bounds = array<i64: 1, 64>}, {pipeline_mode = #tpu.pipeline_mode<synchronous>, transform_indices = @transform_7, window_bounds = array<i64: 64, 128>}, {pipeline_mode = #tpu.pipeline_mode<synchronous>, transform_indices = @transform_8, window_bounds = array<i64: 1, 128>}, {pipeline_mode = #tpu.pipeline_mode<synchronous>, transform_indices = @transform_9, window_bounds = array<i64: 64, 256>}, {pipeline_mode = #tpu.pipeline_mode<synchronous>, transform_indices = @transform_10, window_bounds = array<i64: 1, 256>}, {pipeline_mode = #tpu.pipeline_mode<synchronous>, transform_indices = @transform_11, window_bounds = array<i64: 256, 64>}, {pipeline_mode = #tpu.pipeline_mode<synchronous>, transform_indices = @transform_12, window_bounds = array<i64: 1, 64>}, {transform_indices = @transform_13, window_bounds = array<i64: 8, 64>}]} {
    %c0 = arith.constant 0 : index
    %c0_0 = arith.constant 0 : index
    %0 = vector.load %arg1[%c0, %c0_0] : memref<8x64xf32, #tpu.memory_space<vmem>>, vector<8x64xf32>
    %c0_1 = arith.constant 0 : index
    %c0_2 = arith.constant 0 : index
    %1 = vector.load %arg2[%c0_1, %c0_2] : memref<1x64xf32, #tpu.memory_space<vmem>>, vector<1x64xf32>
    %2 = arith.mulf %0, %0 : vector<8x64xf32>
    %cst = arith.constant dense<0.000000e+00> : vector<8xf32>
    %3 = vector.multi_reduction <add>, %2, %cst [1] : vector<8x64xf32> to vector<8xf32>
    %4 = vector.shape_cast %3 : vector<8xf32> to vector<8x1xf32>
    %cst_3 = arith.constant 6.400000e+01 : f32
    %5 = vector.broadcast %cst_3 : f32 to vector<8x1xf32>
    %6 = arith.divf %4, %5 : vector<8x1xf32>
    %cst_4 = arith.constant 9.99999997E-7 : f32
    %7 = vector.broadcast %cst_4 : f32 to vector<8x1xf32>
    %8 = arith.addf %6, %7 : vector<8x1xf32>
    %9 = math.rsqrt %8 : vector<8x1xf32>
    %10 = vector.broadcast %9 : vector<8x1xf32> to vector<8x64xf32>
    %11 = arith.mulf %0, %10 : vector<8x64xf32>
    %12 = vector.broadcast %1 : vector<1x64xf32> to vector<8x64xf32>
    %13 = arith.mulf %11, %12 : vector<8x64xf32>
    %c0_5 = arith.constant 0 : index
    %c0_6 = arith.constant 0 : index
    %14 = vector.load %arg3[%c0_5, %c0_6] : memref<64x192xbf16, #tpu.memory_space<vmem>>, vector<64x192xbf16>
    %15 = arith.truncf %13 : vector<8x64xf32> to vector<8x64xbf16>
    %cst_7 = arith.constant dense<0.000000e+00> : vector<8x192xf32>
    %16 = tpu.matmul %15, %14, %cst_7 {dimension_numbers = #tpu.dot_dimension_numbers<[1], [0], [0], [1], [0, 0, 1, 1], [], []>} : vector<8x64xbf16>, vector<64x192xbf16>, vector<8x192xf32> -> vector<8x192xf32>
    %c0_8 = arith.constant 0 : index
    %c0_9 = arith.constant 0 : index
    %17 = vector.load %arg4[%c0_8, %c0_9] : memref<1x192xf32, #tpu.memory_space<vmem>>, vector<1x192xf32>
    %18 = vector.broadcast %17 : vector<1x192xf32> to vector<8x192xf32>
    %19 = arith.addf %16, %18 : vector<8x192xf32>
    %20 = vector.extract_strided_slice %19 {offsets = [0, 0], sizes = [8, 64], strides = [1, 1]} : vector<8x192xf32> to vector<8x64xf32>
    %cst_10 = arith.constant 2.500000e-01 : f32
    %21 = vector.broadcast %cst_10 : f32 to vector<8x64xf32>
    %22 = arith.mulf %20, %21 : vector<8x64xf32>
    %23 = arith.truncf %22 : vector<8x64xf32> to vector<8x64xbf16>
    %24 = vector.extract_strided_slice %19 {offsets = [0, 64], sizes = [8, 64], strides = [1, 1]} : vector<8x192xf32> to vector<8x64xf32>
    %25 = arith.truncf %24 : vector<8x64xf32> to vector<8x64xbf16>
    %26 = vector.extract_strided_slice %19 {offsets = [0, 128], sizes = [8, 64], strides = [1, 1]} : vector<8x192xf32> to vector<8x64xf32>
    %27 = arith.truncf %26 : vector<8x64xf32> to vector<8x64xbf16>
    %28 = vector.extract_strided_slice %23 {offsets = [0, 0], sizes = [8, 16], strides = [1, 1]} : vector<8x64xbf16> to vector<8x16xbf16>
    %29 = vector.extract_strided_slice %25 {offsets = [0, 0], sizes = [8, 16], strides = [1, 1]} : vector<8x64xbf16> to vector<8x16xbf16>
    %30 = vector.extract_strided_slice %27 {offsets = [0, 0], sizes = [8, 16], strides = [1, 1]} : vector<8x64xbf16> to vector<8x16xbf16>
    %cst_11 = arith.constant dense<0.000000e+00> : vector<8x8xf32>
    %31 = tpu.matmul %28, %29, %cst_11 {dimension_numbers = #tpu.dot_dimension_numbers<[1], [1], [0], [0], [0, 0, 1, 0], [], []>} : vector<8x16xbf16>, vector<8x16xbf16>, vector<8x8xf32> -> vector<8x8xf32>
    %cst_12 = arith.constant dense<0xFF800000> : vector<8xf32>
    %32 = vector.multi_reduction <maximumf>, %31, %cst_12 [1] : vector<8x8xf32> to vector<8xf32>
    %33 = vector.shape_cast %32 : vector<8xf32> to vector<8x1xf32>
    %34 = vector.broadcast %33 : vector<8x1xf32> to vector<8x8xf32>
    %35 = arith.subf %31, %34 : vector<8x8xf32>
    %36 = math.exp %35 : vector<8x8xf32>
    %cst_13 = arith.constant dense<0.000000e+00> : vector<8xf32>
    %37 = vector.multi_reduction <add>, %36, %cst_13 [1] : vector<8x8xf32> to vector<8xf32>
    %38 = vector.shape_cast %37 : vector<8xf32> to vector<8x1xf32>
    %39 = tpu.reciprocal %38 {approx = true} : vector<8x1xf32> -> vector<8x1xf32>
    %40 = vector.broadcast %39 : vector<8x1xf32> to vector<8x8xf32>
    %41 = arith.mulf %36, %40 : vector<8x8xf32>
    %42 = arith.truncf %41 : vector<8x8xf32> to vector<8x8xbf16>
    %cst_14 = arith.constant dense<0.000000e+00> : vector<8x16xf32>
    %43 = tpu.matmul %42, %30, %cst_14 {dimension_numbers = #tpu.dot_dimension_numbers<[1], [0], [0], [1], [0, 0, 1, 1], [], []>} : vector<8x8xbf16>, vector<8x16xbf16>, vector<8x16xf32> -> vector<8x16xf32>
    %44 = vector.extract_strided_slice %23 {offsets = [0, 16], sizes = [8, 16], strides = [1, 1]} : vector<8x64xbf16> to vector<8x16xbf16>
    %45 = vector.extract_strided_slice %25 {offsets = [0, 16], sizes = [8, 16], strides = [1, 1]} : vector<8x64xbf16> to vector<8x16xbf16>
    %46 = vector.extract_strided_slice %27 {offsets = [0, 16], sizes = [8, 16], strides = [1, 1]} : vector<8x64xbf16> to vector<8x16xbf16>
    %cst_15 = arith.constant dense<0.000000e+00> : vector<8x8xf32>
    %47 = tpu.matmul %44, %45, %cst_15 {dimension_numbers = #tpu.dot_dimension_numbers<[1], [1], [0], [0], [0, 0, 1, 0], [], []>} : vector<8x16xbf16>, vector<8x16xbf16>, vector<8x8xf32> -> vector<8x8xf32>
    %cst_16 = arith.constant dense<0xFF800000> : vector<8xf32>
    %48 = vector.multi_reduction <maximumf>, %47, %cst_16 [1] : vector<8x8xf32> to vector<8xf32>
    %49 = vector.shape_cast %48 : vector<8xf32> to vector<8x1xf32>
    %50 = vector.broadcast %49 : vector<8x1xf32> to vector<8x8xf32>
    %51 = arith.subf %47, %50 : vector<8x8xf32>
    %52 = math.exp %51 : vector<8x8xf32>
    %cst_17 = arith.constant dense<0.000000e+00> : vector<8xf32>
    %53 = vector.multi_reduction <add>, %52, %cst_17 [1] : vector<8x8xf32> to vector<8xf32>
    %54 = vector.shape_cast %53 : vector<8xf32> to vector<8x1xf32>
    %55 = tpu.reciprocal %54 {approx = true} : vector<8x1xf32> -> vector<8x1xf32>
    %56 = vector.broadcast %55 : vector<8x1xf32> to vector<8x8xf32>
    %57 = arith.mulf %52, %56 : vector<8x8xf32>
    %58 = arith.truncf %57 : vector<8x8xf32> to vector<8x8xbf16>
    %cst_18 = arith.constant dense<0.000000e+00> : vector<8x16xf32>
    %59 = tpu.matmul %58, %46, %cst_18 {dimension_numbers = #tpu.dot_dimension_numbers<[1], [0], [0], [1], [0, 0, 1, 1], [], []>} : vector<8x8xbf16>, vector<8x16xbf16>, vector<8x16xf32> -> vector<8x16xf32>
    %60 = vector.extract_strided_slice %23 {offsets = [0, 32], sizes = [8, 16], strides = [1, 1]} : vector<8x64xbf16> to vector<8x16xbf16>
    %61 = vector.extract_strided_slice %25 {offsets = [0, 32], sizes = [8, 16], strides = [1, 1]} : vector<8x64xbf16> to vector<8x16xbf16>
    %62 = vector.extract_strided_slice %27 {offsets = [0, 32], sizes = [8, 16], strides = [1, 1]} : vector<8x64xbf16> to vector<8x16xbf16>
    %cst_19 = arith.constant dense<0.000000e+00> : vector<8x8xf32>
    %63 = tpu.matmul %60, %61, %cst_19 {dimension_numbers = #tpu.dot_dimension_numbers<[1], [1], [0], [0], [0, 0, 1, 0], [], []>} : vector<8x16xbf16>, vector<8x16xbf16>, vector<8x8xf32> -> vector<8x8xf32>
    %cst_20 = arith.constant dense<0xFF800000> : vector<8xf32>
    %64 = vector.multi_reduction <maximumf>, %63, %cst_20 [1] : vector<8x8xf32> to vector<8xf32>
    %65 = vector.shape_cast %64 : vector<8xf32> to vector<8x1xf32>
    %66 = vector.broadcast %65 : vector<8x1xf32> to vector<8x8xf32>
    %67 = arith.subf %63, %66 : vector<8x8xf32>
    %68 = math.exp %67 : vector<8x8xf32>
    %cst_21 = arith.constant dense<0.000000e+00> : vector<8xf32>
    %69 = vector.multi_reduction <add>, %68, %cst_21 [1] : vector<8x8xf32> to vector<8xf32>
    %70 = vector.shape_cast %69 : vector<8xf32> to vector<8x1xf32>
    %71 = tpu.reciprocal %70 {approx = true} : vector<8x1xf32> -> vector<8x1xf32>
    %72 = vector.broadcast %71 : vector<8x1xf32> to vector<8x8xf32>
    %73 = arith.mulf %68, %72 : vector<8x8xf32>
    %74 = arith.truncf %73 : vector<8x8xf32> to vector<8x8xbf16>
    %cst_22 = arith.constant dense<0.000000e+00> : vector<8x16xf32>
    %75 = tpu.matmul %74, %62, %cst_22 {dimension_numbers = #tpu.dot_dimension_numbers<[1], [0], [0], [1], [0, 0, 1, 1], [], []>} : vector<8x8xbf16>, vector<8x16xbf16>, vector<8x16xf32> -> vector<8x16xf32>
    %76 = vector.extract_strided_slice %23 {offsets = [0, 48], sizes = [8, 16], strides = [1, 1]} : vector<8x64xbf16> to vector<8x16xbf16>
    %77 = vector.extract_strided_slice %25 {offsets = [0, 48], sizes = [8, 16], strides = [1, 1]} : vector<8x64xbf16> to vector<8x16xbf16>
    %78 = vector.extract_strided_slice %27 {offsets = [0, 48], sizes = [8, 16], strides = [1, 1]} : vector<8x64xbf16> to vector<8x16xbf16>
    %cst_23 = arith.constant dense<0.000000e+00> : vector<8x8xf32>
    %79 = tpu.matmul %76, %77, %cst_23 {dimension_numbers = #tpu.dot_dimension_numbers<[1], [1], [0], [0], [0, 0, 1, 0], [], []>} : vector<8x16xbf16>, vector<8x16xbf16>, vector<8x8xf32> -> vector<8x8xf32>
    %cst_24 = arith.constant dense<0xFF800000> : vector<8xf32>
    %80 = vector.multi_reduction <maximumf>, %79, %cst_24 [1] : vector<8x8xf32> to vector<8xf32>
    %81 = vector.shape_cast %80 : vector<8xf32> to vector<8x1xf32>
    %82 = vector.broadcast %81 : vector<8x1xf32> to vector<8x8xf32>
    %83 = arith.subf %79, %82 : vector<8x8xf32>
    %84 = math.exp %83 : vector<8x8xf32>
    %cst_25 = arith.constant dense<0.000000e+00> : vector<8xf32>
    %85 = vector.multi_reduction <add>, %84, %cst_25 [1] : vector<8x8xf32> to vector<8xf32>
    %86 = vector.shape_cast %85 : vector<8xf32> to vector<8x1xf32>
    %87 = tpu.reciprocal %86 {approx = true} : vector<8x1xf32> -> vector<8x1xf32>
    %88 = vector.broadcast %87 : vector<8x1xf32> to vector<8x8xf32>
    %89 = arith.mulf %84, %88 : vector<8x8xf32>
    %90 = arith.truncf %89 : vector<8x8xf32> to vector<8x8xbf16>
    %cst_26 = arith.constant dense<0.000000e+00> : vector<8x16xf32>
    %91 = tpu.matmul %90, %78, %cst_26 {dimension_numbers = #tpu.dot_dimension_numbers<[1], [0], [0], [1], [0, 0, 1, 1], [], []>} : vector<8x8xbf16>, vector<8x16xbf16>, vector<8x16xf32> -> vector<8x16xf32>
    %92 = tpu.concatenate %43, %59, %75, %91 in 1 : vector<8x16xf32>, vector<8x16xf32>, vector<8x16xf32>, vector<8x16xf32> -> vector<8x64xf32>
    %c0_27 = arith.constant 0 : index
    %c0_28 = arith.constant 0 : index
    %93 = vector.load %arg5[%c0_27, %c0_28] : memref<64x64xbf16, #tpu.memory_space<vmem>>, vector<64x64xbf16>
    %94 = arith.truncf %92 : vector<8x64xf32> to vector<8x64xbf16>
    %cst_29 = arith.constant dense<0.000000e+00> : vector<8x64xf32>
    %95 = tpu.matmul %94, %93, %cst_29 {dimension_numbers = #tpu.dot_dimension_numbers<[1], [0], [0], [1], [0, 0, 1, 1], [], []>} : vector<8x64xbf16>, vector<64x64xbf16>, vector<8x64xf32> -> vector<8x64xf32>
    %96 = arith.addf %0, %95 : vector<8x64xf32>
    %c0_30 = arith.constant 0 : index
    %c0_31 = arith.constant 0 : index
    %97 = vector.load %arg6[%c0_30, %c0_31] : memref<1x64xf32, #tpu.memory_space<vmem>>, vector<1x64xf32>
    %98 = vector.broadcast %97 : vector<1x64xf32> to vector<8x64xf32>
    %99 = arith.addf %96, %98 : vector<8x64xf32>
    %c0_32 = arith.constant 0 : index
    %c0_33 = arith.constant 0 : index
    %100 = vector.load %arg7[%c0_32, %c0_33] : memref<1x64xf32, #tpu.memory_space<vmem>>, vector<1x64xf32>
    %101 = arith.mulf %99, %99 : vector<8x64xf32>
    %cst_34 = arith.constant dense<0.000000e+00> : vector<8xf32>
    %102 = vector.multi_reduction <add>, %101, %cst_34 [1] : vector<8x64xf32> to vector<8xf32>
    %103 = vector.shape_cast %102 : vector<8xf32> to vector<8x1xf32>
    %cst_35 = arith.constant 6.400000e+01 : f32
    %104 = vector.broadcast %cst_35 : f32 to vector<8x1xf32>
    %105 = arith.divf %103, %104 : vector<8x1xf32>
    %cst_36 = arith.constant 9.99999997E-7 : f32
    %106 = vector.broadcast %cst_36 : f32 to vector<8x1xf32>
    %107 = arith.addf %105, %106 : vector<8x1xf32>
    %108 = math.rsqrt %107 : vector<8x1xf32>
    %109 = vector.broadcast %108 : vector<8x1xf32> to vector<8x64xf32>
    %110 = arith.mulf %99, %109 : vector<8x64xf32>
    %111 = vector.broadcast %100 : vector<1x64xf32> to vector<8x64xf32>
    %112 = arith.mulf %110, %111 : vector<8x64xf32>
    %c0_37 = arith.constant 0 : index
    %c0_38 = arith.constant 0 : index
    %113 = vector.load %arg8[%c0_37, %c0_38] : memref<64x128xbf16, #tpu.memory_space<vmem>>, vector<64x128xbf16>
    %114 = arith.truncf %112 : vector<8x64xf32> to vector<8x64xbf16>
    %cst_39 = arith.constant dense<0.000000e+00> : vector<8x128xf32>
    %115 = tpu.matmul %114, %113, %cst_39 {dimension_numbers = #tpu.dot_dimension_numbers<[1], [0], [0], [1], [0, 0, 1, 1], [], []>} : vector<8x64xbf16>, vector<64x128xbf16>, vector<8x128xf32> -> vector<8x128xf32>
    %c0_40 = arith.constant 0 : index
    %c0_41 = arith.constant 0 : index
    %116 = vector.load %arg9[%c0_40, %c0_41] : memref<1x128xf32, #tpu.memory_space<vmem>>, vector<1x128xf32>
    %117 = vector.broadcast %116 : vector<1x128xf32> to vector<8x128xf32>
    %118 = arith.addf %115, %117 : vector<8x128xf32>
    %119 = vector.extract_strided_slice %118 {offsets = [0, 0], sizes = [8, 64], strides = [1, 1]} : vector<8x128xf32> to vector<8x64xf32>
    %120 = arith.mulf %112, %119 : vector<8x64xf32>
    %121 = vector.extract_strided_slice %118 {offsets = [0, 64], sizes = [8, 64], strides = [1, 1]} : vector<8x128xf32> to vector<8x64xf32>
    %122 = arith.addf %120, %121 : vector<8x64xf32>
    %c0_42 = arith.constant 0 : index
    %c0_43 = arith.constant 0 : index
    %123 = vector.load %arg10[%c0_42, %c0_43] : memref<64x256xbf16, #tpu.memory_space<vmem>>, vector<64x256xbf16>
    %124 = arith.truncf %122 : vector<8x64xf32> to vector<8x64xbf16>
    %cst_44 = arith.constant dense<0.000000e+00> : vector<8x256xf32>
    %125 = tpu.matmul %124, %123, %cst_44 {dimension_numbers = #tpu.dot_dimension_numbers<[1], [0], [0], [1], [0, 0, 1, 1], [], []>} : vector<8x64xbf16>, vector<64x256xbf16>, vector<8x256xf32> -> vector<8x256xf32>
    %c0_45 = arith.constant 0 : index
    %c0_46 = arith.constant 0 : index
    %126 = vector.load %arg11[%c0_45, %c0_46] : memref<1x256xf32, #tpu.memory_space<vmem>>, vector<1x256xf32>
    %127 = vector.broadcast %126 : vector<1x256xf32> to vector<8x256xf32>
    %128 = arith.addf %125, %127 : vector<8x256xf32>
    %129 = arith.mulf %128, %128 : vector<8x256xf32>
    %130 = arith.mulf %128, %129 : vector<8x256xf32>
    %cst_47 = arith.constant 4.471500e-02 : f32
    %131 = vector.broadcast %cst_47 : f32 to vector<8x256xf32>
    %132 = arith.mulf %131, %130 : vector<8x256xf32>
    %133 = arith.addf %128, %132 : vector<8x256xf32>
    %cst_48 = arith.constant 0.797884583 : f32
    %134 = vector.broadcast %cst_48 : f32 to vector<8x256xf32>
    %135 = arith.mulf %134, %133 : vector<8x256xf32>
    %136 = math.tanh %135 : vector<8x256xf32>
    %cst_49 = arith.constant 1.000000e+00 : f32
    %137 = vector.broadcast %cst_49 : f32 to vector<8x256xf32>
    %138 = arith.addf %137, %136 : vector<8x256xf32>
    %cst_50 = arith.constant 5.000000e-01 : f32
    %139 = vector.broadcast %cst_50 : f32 to vector<8x256xf32>
    %140 = arith.mulf %139, %138 : vector<8x256xf32>
    %141 = arith.mulf %128, %140 : vector<8x256xf32>
    %c0_51 = arith.constant 0 : index
    %c0_52 = arith.constant 0 : index
    %142 = vector.load %arg12[%c0_51, %c0_52] : memref<256x64xbf16, #tpu.memory_space<vmem>>, vector<256x64xbf16>
    %143 = arith.truncf %141 : vector<8x256xf32> to vector<8x256xbf16>
    %cst_53 = arith.constant dense<0.000000e+00> : vector<8x64xf32>
    %144 = tpu.matmul %143, %142, %cst_53 {dimension_numbers = #tpu.dot_dimension_numbers<[1], [0], [0], [1], [0, 0, 1, 1], [], []>} : vector<8x256xbf16>, vector<256x64xbf16>, vector<8x64xf32> -> vector<8x64xf32>
    %c0_54 = arith.constant 0 : index
    %c0_55 = arith.constant 0 : index
    %145 = vector.load %arg13[%c0_54, %c0_55] : memref<1x64xf32, #tpu.memory_space<vmem>>, vector<1x64xf32>
    %146 = vector.broadcast %145 : vector<1x64xf32> to vector<8x64xf32>
    %147 = arith.addf %144, %146 : vector<8x64xf32>
    %148 = arith.addf %99, %147 : vector<8x64xf32>
    %c0_56 = arith.constant 0 : index
    %c0_57 = arith.constant 0 : index
    %149 = vector.load %arg14[%c0_56, %c0_57] : memref<8x64xf32, #tpu.memory_space<vmem>>, vector<8x64xf32>
    tpu.vector_store %arg14[%c0_56, %c0_57], %148 {strides = array<i32>} : memref<8x64xf32, #tpu.memory_space<vmem>>, vector<8x64xf32>,
    return
  }
  func.func @transform_0(%arg0: i32) -> (i32, i32) {
    %c0_i32 = arith.constant 0 : i32
    %c0_i32_0 = arith.constant 0 : i32
    return %arg0, %c0_i32 : i32, i32
  }
  func.func @transform_1(%arg0: i32) -> (i32, i32) {
    %c0_i32 = arith.constant 0 : i32
    %c0_i32_0 = arith.constant 0 : i32
    %c0_i32_1 = arith.constant 0 : i32
    return %c0_i32, %c0_i32_0 : i32, i32
  }
  func.func @transform_2(%arg0: i32) -> (i32, i32) {
    %c0_i32 = arith.constant 0 : i32
    %c0_i32_0 = arith.constant 0 : i32
    %c0_i32_1 = arith.constant 0 : i32
    return %c0_i32, %c0_i32_0 : i32, i32
  }
  func.func @transform_3(%arg0: i32) -> (i32, i32) {
    %c0_i32 = arith.constant 0 : i32
    %c0_i32_0 = arith.constant 0 : i32
    %c0_i32_1 = arith.constant 0 : i32
    return %c0_i32, %c0_i32_0 : i32, i32
  }
  func.func @transform_4(%arg0: i32) -> (i32, i32) {
    %c0_i32 = arith.constant 0 : i32
    %c0_i32_0 = arith.constant 0 : i32
    %c0_i32_1 = arith.constant 0 : i32
    return %c0_i32, %c0_i32_0 : i32, i32
  }
  func.func @transform_5(%arg0: i32) -> (i32, i32) {
    %c0_i32 = arith.constant 0 : i32
    %c0_i32_0 = arith.constant 0 : i32
    %c0_i32_1 = arith.constant 0 : i32
    return %c0_i32, %c0_i32_0 : i32, i32
  }
  func.func @transform_6(%arg0: i32) -> (i32, i32) {
    %c0_i32 = arith.constant 0 : i32
    %c0_i32_0 = arith.constant 0 : i32
    %c0_i32_1 = arith.constant 0 : i32
    return %c0_i32, %c0_i32_0 : i32, i32
  }
  func.func @transform_7(%arg0: i32) -> (i32, i32) {
    %c0_i32 = arith.constant 0 : i32
    %c0_i32_0 = arith.constant 0 : i32
    %c0_i32_1 = arith.constant 0 : i32
    return %c0_i32, %c0_i32_0 : i32, i32
  }
  func.func @transform_8(%arg0: i32) -> (i32, i32) {
    %c0_i32 = arith.constant 0 : i32
    %c0_i32_0 = arith.constant 0 : i32
    %c0_i32_1 = arith.constant 0 : i32
    return %c0_i32, %c0_i32_0 : i32, i32
  }
  func.func @transform_9(%arg0: i32) -> (i32, i32) {
    %c0_i32 = arith.constant 0 : i32
    %c0_i32_0 = arith.constant 0 : i32
    %c0_i32_1 = arith.constant 0 : i32
    return %c0_i32, %c0_i32_0 : i32, i32
  }
  func.func @transform_10(%arg0: i32) -> (i32, i32) {
    %c0_i32 = arith.constant 0 : i32
    %c0_i32_0 = arith.constant 0 : i32
    %c0_i32_1 = arith.constant 0 : i32
    return %c0_i32, %c0_i32_0 : i32, i32
  }
  func.func @transform_11(%arg0: i32) -> (i32, i32) {
    %c0_i32 = arith.constant 0 : i32
    %c0_i32_0 = arith.constant 0 : i32
    %c0_i32_1 = arith.constant 0 : i32
    return %c0_i32, %c0_i32_0 : i32, i32
  }
  func.func @transform_12(%arg0: i32) -> (i32, i32) {
    %c0_i32 = arith.constant 0 : i32
    %c0_i32_0 = arith.constant 0 : i32
    %c0_i32_1 = arith.constant 0 : i32
    return %c0_i32, %c0_i32_0 : i32, i32
  }
  func.func @transform_13(%arg0: i32) -> (i32, i32) {
    %c0_i32 = arith.constant 0 : i32
    %c0_i32_0 = arith.constant 0 : i32
    return %arg0, %c0_i32 : i32, i32
  }
}

</mosaic_0001>

<llo_original>
// kernel: _lambda_.5
$region0: #{_lambda_.5}
  #allocation0 [shape = 'u32[]', space=smem, size = 0x4, offset = 0x4, fixed_abs, tag = 'smem constant byte address 0x4 - core index']
  #allocation1 [shape = 'u32[144,128]{1,0:T(1,128)}', space=vmem, size = 0x12000, scoped, tag = 'internal scratch']
  %s0 = inlined_call_operand.vmem [shape: f32[16,64], index: 0, kind: input, shape index: {}]
  %s1 = inlined_call_operand.vmem [shape: f32[1,64], index: 1, kind: input, shape index: {}]
  %s2 = inlined_call_operand.vmem [shape: bf16[64,256], index: 2, kind: input, shape index: {}]
  %s3 = inlined_call_operand.vmem [shape: f32[1,256], index: 3, kind: input, shape index: {}]
  %s4 = inlined_call_operand.vmem [shape: s32[16,4], index: 4, kind: output, shape index: {}]
  %s5 = sld [smem:[#allocation0]]
  $region26: #{_lambda_.5} parent=0
    _
  %s7 = ssub.s32 1, %s5
  %s8 = scalar_select 0, %s7, %s5
  // Predicated region
  $region2: #{_lambda_.5} parent=0 // pred_check
    _
  $region3: #{_lambda_.5} parent=0 // pred_check_branch
    %10 = sbr.rel (0) target = $region5
  $region4: #{_lambda_.5} parent=0 // pred_region
    _
  $region5: #{_lambda_.5} parent=0 // pred_fallthru
    _
  // Predicated region
  $region6: #{_lambda_.5} parent=0 // pred_check
    _
  $region7: #{_lambda_.5} parent=0 // pred_check_branch
    %12 = sbr.rel (0) target = $region9
  $region8: #{_lambda_.5} parent=0 // pred_region
    _
  $region9: #{_lambda_.5} parent=0 // pred_fallthru
    _
  // Predicated region
  $region10: #{_lambda_.5} parent=0 // pred_check
    _
  $region11: #{_lambda_.5} parent=0 // pred_check_branch
    %14 = sbr.rel (0) target = $region13
  $region12: #{_lambda_.5} parent=0 // pred_region
    _
  $region13: #{_lambda_.5} parent=0 // pred_fallthru
    _
  // Predicated region
  $region14: #{_lambda_.5} parent=0 // pred_check
    _
  $region15: #{_lambda_.5} parent=0 // pred_check_branch
    %16 = sbr.rel (0) target = $region17
  $region16: #{_lambda_.5} parent=0 // pred_region
    _
  $region17: #{_lambda_.5} parent=0 // pred_fallthru
    _
  %v18 = vld [vmem:[%s0] sm:$0xff]
  %v19 = vld [vmem:[%s0 + $0x8] sm:$0xff]
  %v20 = vld [vmem:[%s1] sm:$0x1]
  %v21 = vmul.f32 %v18, %v18
  %v22 = vmul.f32 %v19, %v19
  %vm23 = vcmask 523264
  %v24 = vsel %vm23, %v21, 0.0
  %25 = vadd.xlane.f32.xlu0 %v24
  %v26 = vpop.xlane.xlu0 %25
  %v27 = vsel %vm23, %v22, 0.0
  %28 = vadd.xlane.f32.xlu0 %v27
  %v29 = vpop.xlane.xlu0 %28
  %v30 = vrcp.pop 64.0
  %v31 = vmul.f32 %v26, %v30
  %v32 = vmul.f32 %v29, %v30
  %v33 = vadd.f32 %v31, 1e-06
  %v34 = vadd.f32 %v32, 1e-06
  %v35 = vrsqrt.pop %v33
  %v36 = vrsqrt.pop %v34
  %v37 = vmul.f32 %v18, %v35
  %v38 = vmul.f32 %v19, %v36
  %v40 = vlaneseq
  %v41 = vshrl.u32 %v40, 7
  %v42 = vsub.s32 0, %v41
  %v43 = vrot.slane %v20, %v42
  %v45 = vmul.f32 %v37, %v43
  %v46 = vmul.f32 %v38, %v43
  %v47 = vld [vmem:[%s2] sm:$0xff]
  %v48 = vld [vmem:[%s2 + $0x8] sm:$0xff]
  %v49 = vld [vmem:[%s2 + $0x10] sm:$0xff]
  %v50 = vld [vmem:[%s2 + $0x18] sm:$0xff]
  %v51 = vld [vmem:[%s2 + $0x20] sm:$0xff]
  %v52 = vld [vmem:[%s2 + $0x28] sm:$0xff]
  %v53 = vld [vmem:[%s2 + $0x30] sm:$0xff]
  %v54 = vld [vmem:[%s2 + $0x38] sm:$0xff]
  %v55 = vpack.c.bf16 %v46, %v45
  %v56 = vld [vmem:[%s3] sm:$0x3]
  %v58 = vlaneseq
  %v59 = vshrl.u32 %v58, 7
  %v60 = vsub.s32 0, %v59
  %v61 = vrot.slane %v56, %v60
  %v62 = vlaneseq
  %v63 = vshrl.u32 %v62, 7
  %v64 = vsub.s32 1, %v63
  %v65 = vrot.slane %v56, %v64
  %v76 = vunpack.c.l.b16 %v47
  %v77 = vunpack.c.h.b16 %v47
  %v78 = vunpack.c.l.b16 %v48
  %v79 = vunpack.c.h.b16 %v48
  %v80 = vunpack.c.l.b16 %v49
  %v81 = vunpack.c.h.b16 %v49
  %v82 = vunpack.c.l.b16 %v50
  %v83 = vunpack.c.h.b16 %v50
  %v84 = vunpack.c.l.b16 %v51
  %v85 = vunpack.c.h.b16 %v51
  %v86 = vunpack.c.l.b16 %v52
  %v87 = vunpack.c.h.b16 %v52
  %v88 = vunpack.c.l.b16 %v53
  %v89 = vunpack.c.h.b16 %v53
  %v90 = vunpack.c.l.b16 %v54
  %v91 = vunpack.c.h.b16 %v54
  %v92 = vpack.c.b16 %v78, %v76
  %v93 = vpack.c.b16 %v79, %v77
  %v94 = vpack.c.b16 %v82, %v80
  %v95 = vpack.c.b16 %v83, %v81
  %v96 = vpack.c.b16 %v86, %v84
  %v97 = vpack.c.b16 %v87, %v85
  %v98 = vpack.c.b16 %v90, %v88
  %v99 = vpack.c.b16 %v91, %v89
  %v109 = vsel %vm23, %v55, 0
  %111 = vmatprep.subr.bf16.mxu0 0
  %112 = vmatpush1.bf16.msra.mxu0 0
  %113 = vmatprep.subr.bf16.mxu0 0
  %114 = vmatpush1.bf16.msra.mxu0 0
  %115 = vmatprep.subr.bf16.mxu0 0
  %116 = vmatpush1.bf16.msra.mxu0 0
  %117 = vmatprep.subr.bf16.mxu0 0
  %118 = vmatpush1.bf16.msra.mxu0 0
  %119 = vmatprep.subr.bf16.mxu0 %v99
  %120 = vmatpush1.bf16.msra.mxu0 %v98
  %121 = vmatprep.subr.bf16.mxu0 %v97
  %122 = vmatpush1.bf16.msra.mxu0 %v96
  %123 = vmatprep.subr.bf16.mxu0 %v95
  %124 = vmatpush1.bf16.msra.mxu0 %v94
  %125 = vmatprep.subr.bf16.mxu0 %v93
  %126 = vmatpush1.bf16.msra.mxu0 %v92
  %127 = vmatprep.subr.bf16.mxu0 0
  %128 = vmatpush2.bf16.msra.mxu0 0
  %129 = vmatprep.subr.bf16.mxu0 0
  %130 = vmatpush2.bf16.msra.mxu0 0
  %131 = vmatprep.subr.bf16.mxu0 0
  %132 = vmatpush2.bf16.msra.mxu0 0
  %133 = vmatprep.subr.bf16.mxu0 0
  %134 = vmatpush2.bf16.msra.mxu0 0
  %135 = vmatprep.subr.bf16.mxu0 0
  %136 = vmatpush2.bf16.msra.mxu0 0
  %137 = vmatprep.subr.bf16.mxu0 0
  %138 = vmatpush2.bf16.msra.mxu0 0
  %139 = vmatprep.subr.bf16.mxu0 0
  %140 = vmatpush2.bf16.msra.mxu0 0
  %141 = vmatprep.subr.bf16.mxu0 0
  %142 = vmatpush2.bf16.msra.mxu0 0
  %143 = vmatprep.mubr.bf16.mxu0 0
  %144 = vmatmul.mubr.bf16.gmra.mxu0 %v109
  %v145 = vpop.f32.mrf.mxu0
  %v146 = vadd.f32 %v61, %v145
  %v147 = vpop.f32.mrf.mxu0
  %v148 = vadd.f32 %v65, %v147
  %v149 = vpop.f32.mrf.mxu0
  %v150 = vadd.f32 %v61, %v149
  %v151 = vpop.f32.mrf.mxu0
  %v152 = vadd.f32 %v65, %v151
  %153 = vdwg.mxu0
  %v154 = vlaneseq
  %v155 = vand.u32 %v154, 127
  %v156 = vsel %vm23, %v146, -inf
  %157 = vmax.xlane.f32.xlu0 %v156
  %v158 = vpop.xlane.xlu0 %157
  %v159 = vsel %vm23, %v150, -inf
  %160 = vmax.xlane.f32.xlu0 %v159
  %v161 = vpop.xlane.xlu0 %160
  %vm162 = vcmp.eq.f32.partialorder %v146, %v158
  %vm163 = vcmp.eq.f32.partialorder %v150, %v161
  %v164 = vsel %vm162, %v155, 2147483647
  %v165 = vsel %vm163, %v155, 2147483647
  %v166 = vsel %vm23, %v164, 2147483647
  %v167 = vand.u32 %v166, 65535
  %v168 = vshra.s32 %v166, 16
  %v169 = vcvt.s32.f32 %v167
  %v170 = vcvt.s32.f32 %v168
  %171 = vmin.xlane.f32.xlu0 %v170
  %v172 = vpop.xlane.xlu0 %171
  %vm173 = vcmp.eq.f32.partialorder %v170, %v172
  %v174 = vsel %vm173, %v169, inf
  %175 = vmin.xlane.f32.xlu0 %v174
  %v176 = vpop.xlane.xlu0 %175
  %v177 = vcvt.f32.s32 %v176
  %v178 = vcvt.f32.s32 %v172
  %v179 = vshll.u32 %v178, 16
  %v180 = vadd.s32 %v179, %v177
  %v181 = vsel %vm23, %v165, 2147483647
  %v182 = vand.u32 %v181, 65535
  %v183 = vshra.s32 %v181, 16
  %v184 = vcvt.s32.f32 %v182
  %v185 = vcvt.s32.f32 %v183
  %186 = vmin.xlane.f32.xlu0 %v185
  %v187 = vpop.xlane.xlu0 %186
  %vm188 = vcmp.eq.f32.partialorder %v185, %v187
  %v189 = vsel %vm188, %v184, inf
  %190 = vmin.xlane.f32.xlu0 %v189
  %v191 = vpop.xlane.xlu0 %190
  %v192 = vcvt.f32.s32 %v191
  %v193 = vcvt.f32.s32 %v187
  %v194 = vshll.u32 %v193, 16
  %v195 = vadd.s32 %v194, %v192
  %vm196 = vcmask 7168
  %197 = vst.msk [vmem:[%s4] sm:$0xff] %vm196, %v180
  %198 = vst.msk [vmem:[%s4 + $0x8] sm:$0xff] %vm196, %v195
  %vm199 = vcmask 1048064
  %v200 = vsel %vm199, %v146, -inf
  %201 = vmax.xlane.f32.xlu0 %v200
  %v202 = vpop.xlane.xlu0 %201
  %v203 = vsel %vm199, %v150, -inf
  %204 = vmax.xlane.f32.xlu0 %v203
  %v205 = vpop.xlane.xlu0 %204
  %vm206 = vcmp.eq.f32.partialorder %v146, %v202
  %vm207 = vcmp.eq.f32.partialorder %v150, %v205
  %208 = vrot.lane.b32.xlu0 %v155, 64
  %v209 = vpop.permute.xlu0 %208
  %v210 = vsel %vm206, %v209, 2147483647
  %v211 = vsel %vm207, %v209, 2147483647
  %v212 = vsel %vm199, %v210, 2147483647
  %v213 = vand.u32 %v212, 65535
  %v214 = vshra.s32 %v212, 16
  %v215 = vcvt.s32.f32 %v213
  %v216 = vcvt.s32.f32 %v214
  %217 = vmin.xlane.f32.xlu0 %v216
  %v218 = vpop.xlane.xlu0 %217
  %vm219 = vcmp.eq.f32.partialorder %v216, %v218
  %v220 = vsel %vm219, %v215, inf
  %221 = vmin.xlane.f32.xlu0 %v220
  %v222 = vpop.xlane.xlu0 %221
  %v223 = vcvt.f32.s32 %v222
  %v224 = vcvt.f32.s32 %v218
  %v225 = vshll.u32 %v224, 16
  %v226 = vadd.s32 %v225, %v223
  %v227 = vsel %vm199, %v211, 2147483647
  %v228 = vand.u32 %v227, 65535
  %v229 = vshra.s32 %v227, 16
  %v230 = vcvt.s32.f32 %v228
  %v231 = vcvt.s32.f32 %v229
  %232 = vmin.xlane.f32.xlu0 %v231
  %v233 = vpop.xlane.xlu0 %232
  %vm234 = vcmp.eq.f32.partialorder %v231, %v233
  %v235 = vsel %vm234, %v230, inf
  %236 = vmin.xlane.f32.xlu0 %v235
  %v237 = vpop.xlane.xlu0 %236
  %v238 = vcvt.f32.s32 %v237
  %v239 = vcvt.f32.s32 %v233
  %v240 = vshll.u32 %v239, 16
  %v241 = vadd.s32 %v240, %v238
  %vm242 = vcmask 15368
  %243 = vst.msk [vmem:[%s4] sm:$0xff] %vm242, %v226
  %244 = vst.msk [vmem:[%s4 + $0x8] sm:$0xff] %vm242, %v241
  %v245 = vsel %vm23, %v148, -inf
  %246 = vmax.xlane.f32.xlu0 %v245
  %v247 = vpop.xlane.xlu0 %246
  %v248 = vsel %vm23, %v152, -inf
  %249 = vmax.xlane.f32.xlu0 %v248
  %v250 = vpop.xlane.xlu0 %249
  %vm251 = vcmp.eq.f32.partialorder %v148, %v247
  %vm252 = vcmp.eq.f32.partialorder %v152, %v250
  %v253 = vsel %vm251, %v155, 2147483647
  %v254 = vsel %vm252, %v155, 2147483647
  %v255 = vsel %vm23, %v253, 2147483647
  %v256 = vand.u32 %v255, 65535
  %v257 = vshra.s32 %v255, 16
  %v258 = vcvt.s32.f32 %v256
  %v259 = vcvt.s32.f32 %v257
  %260 = vmin.xlane.f32.xlu0 %v259
  %v261 = vpop.xlane.xlu0 %260
  %vm262 = vcmp.eq.f32.partialorder %v259, %v261
  %v263 = vsel %vm262, %v258, inf
  %264 = vmin.xlane.f32.xlu0 %v263
  %v265 = vpop.xlane.xlu0 %264
  %v266 = vcvt.f32.s32 %v265
  %v267 = vcvt.f32.s32 %v261
  %v268 = vshll.u32 %v267, 16
  %v269 = vadd.s32 %v268, %v266
  %v270 = vsel %vm23, %v254, 2147483647
  %v271 = vand.u32 %v270, 65535
  %v272 = vshra.s32 %v270, 16
  %v273 = vcvt.s32.f32 %v271
  %v274 = vcvt.s32.f32 %v272
  %275 = vmin.xlane.f32.xlu0 %v274
  %v276 = vpop.xlane.xlu0 %275
  %vm277 = vcmp.eq.f32.partialorder %v274, %v276
  %v278 = vsel %vm277, %v273, inf
  %279 = vmin.xlane.f32.xlu0 %v278
  %v280 = vpop.xlane.xlu0 %279
  %v281 = vcvt.f32.s32 %v280
  %v282 = vcvt.f32.s32 %v276
  %v283 = vshll.u32 %v282, 16
  %v284 = vadd.s32 %v283, %v281
  %vm285 = vcmask 23568
  %286 = vst.msk [vmem:[%s4] sm:$0xff] %vm285, %v269
  %287 = vst.msk [vmem:[%s4 + $0x8] sm:$0xff] %vm285, %v284
  %v288 = vsel %vm199, %v148, -inf
  %289 = vmax.xlane.f32.xlu0 %v288
  %v290 = vpop.xlane.xlu0 %289
  %v291 = vsel %vm199, %v152, -inf
  %292 = vmax.xlane.f32.xlu0 %v291
  %v293 = vpop.xlane.xlu0 %292
  %vm294 = vcmp.eq.f32.partialorder %v148, %v290
  %vm295 = vcmp.eq.f32.partialorder %v152, %v293
  %v296 = vsel %vm294, %v209, 2147483647
  %v297 = vsel %vm295, %v209, 2147483647
  %v298 = vsel %vm199, %v296, 2147483647
  %v299 = vand.u32 %v298, 65535
  %v300 = vshra.s32 %v298, 16
  %v301 = vcvt.s32.f32 %v299
  %v302 = vcvt.s32.f32 %v300
  %303 = vmin.xlane.f32.xlu0 %v302
  %v304 = vpop.xlane.xlu0 %303
  %vm305 = vcmp.eq.f32.partialorder %v302, %v304
  %v306 = vsel %vm305, %v301, inf
  %307 = vmin.xlane.f32.xlu0 %v306
  %v308 = vpop.xlane.xlu0 %307
  %v309 = vcvt.f32.s32 %v308
  %v310 = vcvt.f32.s32 %v304
  %v311 = vshll.u32 %v310, 16
  %v312 = vadd.s32 %v311, %v309
  %v313 = vsel %vm199, %v297, 2147483647
  %v314 = vand.u32 %v313, 65535
  %v315 = vshra.s32 %v313, 16
  %v316 = vcvt.s32.f32 %v314
  %v317 = vcvt.s32.f32 %v315
  %318 = vmin.xlane.f32.xlu0 %v317
  %v319 = vpop.xlane.xlu0 %318
  %vm320 = vcmp.eq.f32.partialorder %v317, %v319
  %v321 = vsel %vm320, %v316, inf
  %322 = vmin.xlane.f32.xlu0 %v321
  %v323 = vpop.xlane.xlu0 %322
  %v324 = vcvt.f32.s32 %v323
  %v325 = vcvt.f32.s32 %v319
  %v326 = vshll.u32 %v325, 16
  %v327 = vadd.s32 %v326, %v324
  %vm328 = vcmask 31768
  %329 = vst.msk [vmem:[%s4] sm:$0xff] %vm328, %v312
  %330 = vst.msk [vmem:[%s4 + $0x8] sm:$0xff] %vm328, %v327
  // Predicated region
  $region18: #{_lambda_.5} parent=0 // pred_check
    _
  $region19: #{_lambda_.5} parent=0 // pred_check_branch
    %332 = sbr.rel (0) target = $region21
  $region20: #{_lambda_.5} parent=0 // pred_region
    _
  $region21: #{_lambda_.5} parent=0 // pred_fallthru
    _
  // Predicated region
  $region22: #{_lambda_.5} parent=0 // pred_check
    _
  $region23: #{_lambda_.5} parent=0 // pred_check_branch
    %334 = sbr.rel (0) target = $region25
  $region24: #{_lambda_.5} parent=0 // pred_region
    _
  $region25: #{_lambda_.5} parent=0 // pred_fallthru
    _

// kernel: _lambda_.3
$region0: #{_lambda_.3}
  #allocation0 [shape = 'u32[]', space=smem, size = 0x4, offset = 0x4, fixed_abs, tag = 'smem constant byte address 0x4 - core index']
  #allocation1 [shape = 'u32[144,128]{1,0:T(1,128)}', space=vmem, size = 0x12000, scoped, tag = 'internal scratch']
  %s0 = inlined_call_operand.vmem [shape: f32[16,64], index: 0, kind: input, shape index: {}]
  %s1 = inlined_call_operand.vmem [shape: f32[1,64], index: 1, kind: input, shape index: {}, may-alias: {1,6}]
  %s2 = inlined_call_operand.vmem [shape: bf16[64,192], index: 2, kind: input, shape index: {}]
  %s3 = inlined_call_operand.vmem [shape: f32[1,192], index: 3, kind: input, shape index: {}]
  %s4 = inlined_call_operand.vmem [shape: bf16[64,64], index: 4, kind: input, shape index: {}]
  %s5 = inlined_call_operand.vmem [shape: f32[1,64], index: 5, kind: input, shape index: {}, may-alias: {5,12}]
  %s6 = inlined_call_operand.vmem [shape: f32[1,64], index: 6, kind: input, shape index: {}, may-alias: {1,6}]
  %s7 = inlined_call_operand.vmem [shape: bf16[64,128], index: 7, kind: input, shape index: {}]
  %s8 = inlined_call_operand.vmem [shape: f32[1,128], index: 8, kind: input, shape index: {}]
  %s9 = inlined_call_operand.vmem [shape: bf16[64,256], index: 9, kind: input, shape index: {}]
  %s10 = inlined_call_operand.vmem [shape: f32[1,256], index: 10, kind: input, shape index: {}]
  %s11 = inlined_call_operand.vmem [shape: bf16[256,64], index: 11, kind: input, shape index: {}]
  %s12 = inlined_call_operand.vmem [shape: f32[1,64], index: 12, kind: input, shape index: {}, may-alias: {5,12}]
  %s13 = inlined_call_operand.vmem [shape: f32[16,64], index: 13, kind: output, shape index: {}]
  %s14 = sld [smem:[#allocation0]]
  $region85: #{_lambda_.3} parent=0
    _
  %s16 = ssub.s32 1, %s14
  %s17 = scalar_select 0, %s16, %s14
  loop: start=0, step=1, limit=4
  $region2: #{_lambda_.3} parent=0 // loop_pre_header
    _
  $region3: #{_lambda_.3} parent=0 // loop_header
    %s19 = sphi 0, %s23
    %p20 = scmp.ge.s32.totalorder %s19, 4
    %s29 = sphi 0, %s31
    %s32 = sphi 0, %s29
    %s33 = sphi 0, %s32
    %s49 = sphi 0, %s33
    %s53 = sphi 0, %s53
    %s55 = sphi 0, %s53
    %s56 = sphi 0, %s55
    %s70 = sphi 0, %s56
    %s74 = sphi 0, %s74
    %s76 = sphi 0, %s74
    %s77 = sphi 0, %s76
    %s91 = sphi 0, %s77
    %s95 = sphi 0, %s95
    %s97 = sphi 0, %s95
    %s98 = sphi 0, %s97
    %s112 = sphi 0, %s98
    %s116 = sphi 0, %s116
    %s118 = sphi 0, %s116
    %s119 = sphi 0, %s118
    %s133 = sphi 0, %s119
    %s137 = sphi 0, %s137
    %s139 = sphi 0, %s137
    %s140 = sphi 0, %s139
    %s154 = sphi 0, %s140
    %s158 = sphi 0, %s158
    %s160 = sphi 0, %s158
    %s161 = sphi 0, %s160
    %s175 = sphi 0, %s161
    %s179 = sphi 0, %s179
    %s181 = sphi 0, %s179
    %s182 = sphi 0, %s181
    %s196 = sphi 0, %s182
    %s200 = sphi 0, %s200
    %s202 = sphi 0, %s200
    %s203 = sphi 0, %s202
    %s217 = sphi 0, %s203
    %s221 = sphi 0, %s221
    %s223 = sphi 0, %s221
    %s224 = sphi 0, %s223
    %s238 = sphi 0, %s224
    %s242 = sphi 0, %s242
    %s244 = sphi 0, %s242
    %s245 = sphi 0, %s244
    %s259 = sphi 0, %s245
    %s263 = sphi 0, %s263
    %s265 = sphi 0, %s263
    %s266 = sphi 0, %s265
    %s280 = sphi 0, %s266
    %s284 = sphi 0, %s284
    %s286 = sphi 0, %s284
    %s287 = sphi 0, %s286
    %s301 = sphi 0, %s287
    %s307 = sphi 0, %s309
    %s310 = sphi 0, %s307
    %s311 = sphi 0, %s310
    %s327 = sphi 0, %s311
  $region4: #{_lambda_.3} parent=0 // loop_header_branch
    %22 = sbr.rel (%p20) target = $region8
  $region5: #{_lambda_.3} parent=0 // loop_body
    %s24 = ssub.s32 %s19, 1
    %s25 = ssub.s32 %s19, 2
    %s26 = sadd.s32 %s19, 1
    %s27 = ssub.s32 %s19, %s26
    %p28 = scmp.eq.s32.totalorder %s27, 0
    %s30 = sadd.s32 %s29, 1
    %s31 = scalar_select %p28, %s29, %s30
    %p34 = pneg %p28
    %p35 = scmp.eq.s32.totalorder %s19, 1
    %p36 = por %p34, %p35
    %p37 = scmp.ne.s32.totalorder %s29, %s32
    %p38 = scmp.eq.s32.totalorder %s19, 0
    %p39 = por %p37, %p38
    %p40 = scmp.ne.s32.totalorder %s29, %s32
    %p41 = scmp.eq.s32.totalorder %s24, 1
    %p42 = por %p40, %p41
    %p43 = scmp.ne.s32.totalorder %s32, %s33
    %p44 = scmp.eq.s32.totalorder %s24, 0
    %p45 = por %p43, %p44
    %p46 = scmp.ne.s32.totalorder %s32, %s33
    %p47 = scmp.eq.s32.totalorder %s25, 1
    %p48 = por %p46, %p47
    %p50 = scmp.ne.s32.totalorder %s33, %s49
    %p51 = scmp.eq.s32.totalorder %s25, 0
    %p52 = por %p50, %p51
    %s54 = sadd.s32 %s53, 1
    %p57 = scmp.eq.s32.totalorder %s19, 1
    %p58 = scmp.ne.s32.totalorder %s53, %s55
    %p59 = scmp.eq.s32.totalorder %s19, 0
    %p60 = por %p58, %p59
    %p61 = scmp.ne.s32.totalorder %s53, %s55
    %p62 = scmp.eq.s32.totalorder %s24, 1
    %p63 = por %p61, %p62
    %p64 = scmp.ne.s32.totalorder %s55, %s56
    %p65 = scmp.eq.s32.totalorder %s24, 0
    %p66 = por %p64, %p65
    %p67 = scmp.ne.s32.totalorder %s55, %s56
    %p68 = scmp.eq.s32.totalorder %s25, 1
    %p69 = por %p67, %p68
    %p71 = scmp.ne.s32.totalorder %s56, %s70
    %p72 = scmp.eq.s32.totalorder %s25, 0
    %p73 = por %p71, %p72
    %s75 = sadd.s32 %s74, 1
    %p78 = scmp.eq.s32.totalorder %s19, 1
    %p79 = scmp.ne.s32.totalorder %s74, %s76
    %p80 = scmp.eq.s32.totalorder %s19, 0
    %p81 = por %p79, %p80
    %p82 = scmp.ne.s32.totalorder %s74, %s76
    %p83 = scmp.eq.s32.totalorder %s24, 1
    %p84 = por %p82, %p83
    %p85 = scmp.ne.s32.totalorder %s76, %s77
    %p86 = scmp.eq.s32.totalorder %s24, 0
    %p87 = por %p85, %p86
    %p88 = scmp.ne.s32.totalorder %s76, %s77
    %p89 = scmp.eq.s32.totalorder %s25, 1
    %p90 = por %p88, %p89
    %p92 = scmp.ne.s32.totalorder %s77, %s91
    %p93 = scmp.eq.s32.totalorder %s25, 0
    %p94 = por %p92, %p93
    %s96 = sadd.s32 %s95, 1
    %p99 = scmp.eq.s32.totalorder %s19, 1
    %p100 = scmp.ne.s32.totalorder %s95, %s97
    %p101 = scmp.eq.s32.totalorder %s19, 0
    %p102 = por %p100, %p101
    %p103 = scmp.ne.s32.totalorder %s95, %s97
    %p104 = scmp.eq.s32.totalorder %s24, 1
    %p105 = por %p103, %p104
    %p106 = scmp.ne.s32.totalorder %s97, %s98
    %p107 = scmp.eq.s32.totalorder %s24, 0
    %p108 = por %p106, %p107
    %p109 = scmp.ne.s32.totalorder %s97, %s98
    %p110 = scmp.eq.s32.totalorder %s25, 1
    %p111 = por %p109, %p110
    %p113 = scmp.ne.s32.totalorder %s98, %s112
    %p114 = scmp.eq.s32.totalorder %s25, 0
    %p115 = por %p113, %p114
    %s117 = sadd.s32 %s116, 1
    %p120 = scmp.eq.s32.totalorder %s19, 1
    %p121 = scmp.ne.s32.totalorder %s116, %s118
    %p122 = scmp.eq.s32.totalorder %s19, 0
    %p123 = por %p121, %p122
    %p124 = scmp.ne.s32.totalorder %s116, %s118
    %p125 = scmp.eq.s32.totalorder %s24, 1
    %p126 = por %p124, %p125
    %p127 = scmp.ne.s32.totalorder %s118, %s119
    %p128 = scmp.eq.s32.totalorder %s24, 0
    %p129 = por %p127, %p128
    %p130 = scmp.ne.s32.totalorder %s118, %s119
    %p131 = scmp.eq.s32.totalorder %s25, 1
    %p132 = por %p130, %p131
    %p134 = scmp.ne.s32.totalorder %s119, %s133
    %p135 = scmp.eq.s32.totalorder %s25, 0
    %p136 = por %p134, %p135
    %s138 = sadd.s32 %s137, 1
    %p141 = scmp.eq.s32.totalorder %s19, 1
    %p142 = scmp.ne.s32.totalorder %s137, %s139
    %p143 = scmp.eq.s32.totalorder %s19, 0
    %p144 = por %p142, %p143
    %p145 = scmp.ne.s32.totalorder %s137, %s139
    %p146 = scmp.eq.s32.totalorder %s24, 1
    %p147 = por %p145, %p146
    %p148 = scmp.ne.s32.totalorder %s139, %s140
    %p149 = scmp.eq.s32.totalorder %s24, 0
    %p150 = por %p148, %p149
    %p151 = scmp.ne.s32.totalorder %s139, %s140
    %p152 = scmp.eq.s32.totalorder %s25, 1
    %p153 = por %p151, %p152
    %p155 = scmp.ne.s32.totalorder %s140, %s154
    %p156 = scmp.eq.s32.totalorder %s25, 0
    %p157 = por %p155, %p156
    %s159 = sadd.s32 %s158, 1
    %p162 = scmp.eq.s32.totalorder %s19, 1
    %p163 = scmp.ne.s32.totalorder %s158, %s160
    %p164 = scmp.eq.s32.totalorder %s19, 0
    %p165 = por %p163, %p164
    %p166 = scmp.ne.s32.totalorder %s158, %s160
    %p167 = scmp.eq.s32.totalorder %s24, 1
    %p168 = por %p166, %p167
    %p169 = scmp.ne.s32.totalorder %s160, %s161
    %p170 = scmp.eq.s32.totalorder %s24, 0
    %p171 = por %p169, %p170
    %p172 = scmp.ne.s32.totalorder %s160, %s161
    %p173 = scmp.eq.s32.totalorder %s25, 1
    %p174 = por %p172, %p173
    %p176 = scmp.ne.s32.totalorder %s161, %s175
    %p177 = scmp.eq.s32.totalorder %s25, 0
    %p178 = por %p176, %p177
    %s180 = sadd.s32 %s179, 1
    %p183 = scmp.eq.s32.totalorder %s19, 1
    %p184 = scmp.ne.s32.totalorder %s179, %s181
    %p185 = scmp.eq.s32.totalorder %s19, 0
    %p186 = por %p184, %p185
    %p187 = scmp.ne.s32.totalorder %s179, %s181
    %p188 = scmp.eq.s32.totalorder %s24, 1
    %p189 = por %p187, %p188
    %p190 = scmp.ne.s32.totalorder %s181, %s182
    %p191 = scmp.eq.s32.totalorder %s24, 0
    %p192 = por %p190, %p191
    %p193 = scmp.ne.s32.totalorder %s181, %s182
    %p194 = scmp.eq.s32.totalorder %s25, 1
    %p195 = por %p193, %p194
    %p197 = scmp.ne.s32.totalorder %s182, %s196
    %p198 = scmp.eq.s32.totalorder %s25, 0
    %p199 = por %p197, %p198
    %s201 = sadd.s32 %s200, 1
    %p204 = scmp.eq.s32.totalorder %s19, 1
    %p205 = scmp.ne.s32.totalorder %s200, %s202
    %p206 = scmp.eq.s32.totalorder %s19, 0
    %p207 = por %p205, %p206
    %p208 = scmp.ne.s32.totalorder %s200, %s202
    %p209 = scmp.eq.s32.totalorder %s24, 1
    %p210 = por %p208, %p209
    %p211 = scmp.ne.s32.totalorder %s202, %s203
    %p212 = scmp.eq.s32.totalorder %s24, 0
    %p213 = por %p211, %p212
    %p214 = scmp.ne.s32.totalorder %s202, %s203
    %p215 = scmp.eq.s32.totalorder %s25, 1
    %p216 = por %p214, %p215
    %p218 = scmp.ne.s32.totalorder %s203, %s217
    %p219 = scmp.eq.s32.totalorder %s25, 0
    %p220 = por %p218, %p219
    %s222 = sadd.s32 %s221, 1
    %p225 = scmp.eq.s32.totalorder %s19, 1
    %p226 = scmp.ne.s32.totalorder %s221, %s223
    %p227 = scmp.eq.s32.totalorder %s19, 0
    %p228 = por %p226, %p227
    %p229 = scmp.ne.s32.totalorder %s221, %s223
    %p230 = scmp.eq.s32.totalorder %s24, 1
    %p231 = por %p229, %p230
    %p232 = scmp.ne.s32.totalorder %s223, %s224
    %p233 = scmp.eq.s32.totalorder %s24, 0
    %p234 = por %p232, %p233
    %p235 = scmp.ne.s32.totalorder %s223, %s224
    %p236 = scmp.eq.s32.totalorder %s25, 1
    %p237 = por %p235, %p236
    %p239 = scmp.ne.s32.totalorder %s224, %s238
    %p240 = scmp.eq.s32.totalorder %s25, 0
    %p241 = por %p239, %p240
    %s243 = sadd.s32 %s242, 1
    %p246 = scmp.eq.s32.totalorder %s19, 1
    %p247 = scmp.ne.s32.totalorder %s242, %s244
    %p248 = scmp.eq.s32.totalorder %s19, 0
    %p249 = por %p247, %p248
    %p250 = scmp.ne.s32.totalorder %s242, %s244
    %p251 = scmp.eq.s32.totalorder %s24, 1
    %p252 = por %p250, %p251
    %p253 = scmp.ne.s32.totalorder %s244, %s245
    %p254 = scmp.eq.s32.totalorder %s24, 0
    %p255 = por %p253, %p254
    %p256 = scmp.ne.s32.totalorder %s244, %s245
    %p257 = scmp.eq.s32.totalorder %s25, 1
    %p258 = por %p256, %p257
    %p260 = scmp.ne.s32.totalorder %s245, %s259
    %p261 = scmp.eq.s32.totalorder %s25, 0
    %p262 = por %p260, %p261
    %s264 = sadd.s32 %s263, 1
    %p267 = scmp.eq.s32.totalorder %s19, 1
    %p268 = scmp.ne.s32.totalorder %s263, %s265
    %p269 = scmp.eq.s32.totalorder %s19, 0
    %p270 = por %p268, %p269
    %p271 = scmp.ne.s32.totalorder %s263, %s265
    %p272 = scmp.eq.s32.totalorder %s24, 1
    %p273 = por %p271, %p272
    %p274 = scmp.ne.s32.totalorder %s265, %s266
    %p275 = scmp.eq.s32.totalorder %s24, 0
    %p276 = por %p274, %p275
    %p277 = scmp.ne.s32.totalorder %s265, %s266
    %p278 = scmp.eq.s32.totalorder %s25, 1
    %p279 = por %p277, %p278
    %p281 = scmp.ne.s32.totalorder %s266, %s280
    %p282 = scmp.eq.s32.totalorder %s25, 0
    %p283 = por %p281, %p282
    %s285 = sadd.s32 %s284, 1
    %p288 = scmp.eq.s32.totalorder %s19, 1
    %p289 = scmp.ne.s32.totalorder %s284, %s286
    %p290 = scmp.eq.s32.totalorder %s19, 0
    %p291 = por %p289, %p290
    %p292 = scmp.ne.s32.totalorder %s284, %s286
    %p293 = scmp.eq.s32.totalorder %s24, 1
    %p294 = por %p292, %p293
    %p295 = scmp.ne.s32.totalorder %s286, %s287
    %p296 = scmp.eq.s32.totalorder %s24, 0
    %p297 = por %p295, %p296
    %p298 = scmp.ne.s32.totalorder %s286, %s287
    %p299 = scmp.eq.s32.totalorder %s25, 1
    %p300 = por %p298, %p299
    %p302 = scmp.ne.s32.totalorder %s287, %s301
    %p303 = scmp.eq.s32.totalorder %s25, 0
    %p304 = por %p302, %p303
    %s305 = ssub.s32 %s19, %s26
    %p306 = scmp.eq.s32.totalorder %s305, 0
    %s308 = sadd.s32 %s307, 1
    %s309 = scalar_select %p306, %s307, %s308
    %p312 = pneg %p306
    %p313 = scmp.eq.s32.totalorder %s19, 1
    %p314 = por %p312, %p313
    %p315 = scmp.ne.s32.totalorder %s307, %s310
    %p316 = scmp.eq.s32.totalorder %s19, 0
    %p317 = por %p315, %p316
    %p318 = scmp.ne.s32.totalorder %s307, %s310
    %p319 = scmp.eq.s32.totalorder %s24, 1
    %p320 = por %p318, %p319
    %p321 = scmp.ne.s32.totalorder %s310, %s311
    %p322 = scmp.eq.s32.totalorder %s24, 0
    %p323 = por %p321, %p322
    %p324 = scmp.ne.s32.totalorder %s310, %s311
    %p325 = scmp.eq.s32.totalorder %s25, 1
    %p326 = por %p324, %p325
    %p328 = scmp.ne.s32.totalorder %s311, %s327
    %p329 = scmp.eq.s32.totalorder %s25, 0
    %p330 = por %p328, %p329
    %p331 = scmp.le.s32.totalorder 1, %s19
    %p332 = scmp.lt.s32.totalorder %s19, 3
    %p333 = pnand %p331, %p332
    %p334 = pneg %p333
    // Predicated region
    $region9: #{_lambda_.3} parent=5 // pred_check
      _
    $region10: #{_lambda_.3} parent=5 // pred_check_branch
      %336 = sbr.rel (%p333) target = $region12
    $region11: #{_lambda_.3} parent=5 // pred_region
      %s337 = ssub.s32 %s19, 1
      // Predicated region
      $region13: #{_lambda_.3} parent=11 // pred_check
        %p338 = pneg %p66
      $region14: #{_lambda_.3} parent=11 // pred_check_branch
        %340 = sbr.rel (%p338) target = $region16
      $region15: #{_lambda_.3} parent=11 // pred_region
        _
      $region16: #{_lambda_.3} parent=11 // pred_fallthru
        _
      // Predicated region
      $region17: #{_lambda_.3} parent=11 // pred_check
        %p341 = pneg %p87
      $region18: #{_lambda_.3} parent=11 // pred_check_branch
        %343 = sbr.rel (%p341) target = $region20
      $region19: #{_lambda_.3} parent=11 // pred_region
        _
      $region20: #{_lambda_.3} parent=11 // pred_fallthru
        _
      // Predicated region
      $region21: #{_lambda_.3} parent=11 // pred_check
        %p344 = pneg %p108
      $region22: #{_lambda_.3} parent=11 // pred_check_branch
        %346 = sbr.rel (%p344) target = $region24
      $region23: #{_lambda_.3} parent=11 // pred_region
        _
      $region24: #{_lambda_.3} parent=11 // pred_fallthru
        _
      // Predicated region
      $region25: #{_lambda_.3} parent=11 // pred_check
        %p347 = pneg %p129
      $region26: #{_lambda_.3} parent=11 // pred_check_branch
        %349 = sbr.rel (%p347) target = $region28
      $region27: #{_lambda_.3} parent=11 // pred_region
        _
      $region28: #{_lambda_.3} parent=11 // pred_fallthru
        _
      // Predicated region
      $region29: #{_lambda_.3} parent=11 // pred_check
        %p350 = pneg %p150
      $region30: #{_lambda_.3} parent=11 // pred_check_branch
        %352 = sbr.rel (%p350) target = $region32
      $region31: #{_lambda_.3} parent=11 // pred_region
        _
      $region32: #{_lambda_.3} parent=11 // pred_fallthru
        _
      // Predicated region
      $region33: #{_lambda_.3} parent=11 // pred_check
        %p353 = pneg %p171
      $region34: #{_lambda_.3} parent=11 // pred_check_branch
        %355 = sbr.rel (%p353) target = $region36
      $region35: #{_lambda_.3} parent=11 // pred_region
        _
      $region36: #{_lambda_.3} parent=11 // pred_fallthru
        _
      // Predicated region
      $region37: #{_lambda_.3} parent=11 // pred_check
        %p356 = pneg %p192
      $region38: #{_lambda_.3} parent=11 // pred_check_branch
        %358 = sbr.rel (%p356) target = $region40
      $region39: #{_lambda_.3} parent=11 // pred_region
        _
      $region40: #{_lambda_.3} parent=11 // pred_fallthru
        _
      // Predicated region
      $region41: #{_lambda_.3} parent=11 // pred_check
        %p359 = pneg %p213
      $region42: #{_lambda_.3} parent=11 // pred_check_branch
        %361 = sbr.rel (%p359) target = $region44
      $region43: #{_lambda_.3} parent=11 // pred_region
        _
      $region44: #{_lambda_.3} parent=11 // pred_fallthru
        _
      // Predicated region
      $region45: #{_lambda_.3} parent=11 // pred_check
        %p362 = pneg %p234
      $region46: #{_lambda_.3} parent=11 // pred_check_branch
        %364 = sbr.rel (%p362) target = $region48
      $region47: #{_lambda_.3} parent=11 // pred_region
        _
      $region48: #{_lambda_.3} parent=11 // pred_fallthru
        _
      // Predicated region
      $region49: #{_lambda_.3} parent=11 // pred_check
        %p365 = pneg %p255
      $region50: #{_lambda_.3} parent=11 // pred_check_branch
        %367 = sbr.rel (%p365) target = $region52
      $region51: #{_lambda_.3} parent=11 // pred_region
        _
      $region52: #{_lambda_.3} parent=11 // pred_fallthru
        _
      // Predicated region
      $region53: #{_lambda_.3} parent=11 // pred_check
        %p368 = pneg %p276
      $region54: #{_lambda_.3} parent=11 // pred_check_branch
        %370 = sbr.rel (%p368) target = $region56
      $region55: #{_lambda_.3} parent=11 // pred_region
        _
      $region56: #{_lambda_.3} parent=11 // pred_fallthru
        _
      // Predicated region
      $region57: #{_lambda_.3} parent=11 // pred_check
        %p371 = pneg %p297
      $region58: #{_lambda_.3} parent=11 // pred_check_branch
        %373 = sbr.rel (%p371) target = $region60
      $region59: #{_lambda_.3} parent=11 // pred_region
        _
      $region60: #{_lambda_.3} parent=11 // pred_fallthru
        _
    $region12: #{_lambda_.3} parent=5 // pred_fallthru
      _
    %p374 = scmp.lt.s32.totalorder %s19, 2
    // Predicated region
    $region61: #{_lambda_.3} parent=5 // pred_check
      %p375 = pneg %p374
    $region62: #{_lambda_.3} parent=5 // pred_check_branch
      %377 = sbr.rel (%p375) target = $region64
    $region63: #{_lambda_.3} parent=5 // pred_region
      // Predicated region
      $region65: #{_lambda_.3} parent=63 // pred_check
        %p378 = pneg %p39
      $region66: #{_lambda_.3} parent=63 // pred_check_branch
        %380 = sbr.rel (%p378) target = $region68
      $region67: #{_lambda_.3} parent=63 // pred_region
        %p381 = scmp.lt.s32.totalorder %s19, 1
        %s382 = scalar_select %p381, %s19, 1
        %s383 = smul.addr %s382, 8
        %s384 = scalar_lea.vmem %s0, %s383
      $region68: #{_lambda_.3} parent=63 // pred_fallthru
        _
    $region64: #{_lambda_.3} parent=5 // pred_fallthru
      _
    %p385 = scmp.le.s32.totalorder 1, %s19
    %p386 = scmp.lt.s32.totalorder %s19, 3
    %p387 = pnand %p385, %p386
    %p388 = pneg %p387
    // Predicated region
    $region69: #{_lambda_.3} parent=5 // pred_check
      _
    $region70: #{_lambda_.3} parent=5 // pred_check_branch
      %390 = sbr.rel (%p387) target = $region72
    $region71: #{_lambda_.3} parent=5 // pred_region
      %s391 = ssub.s32 %s19, 1
      %p392 = scmp.lt.s32.totalorder %s24, 1
      %s393 = scalar_select %p392, %s24, 1
      %s394 = smul.addr %s393, 8
      %s395 = scalar_lea.vmem %s0, %s394
      %p396 = pneg %p45
      %p397 = pneg %p42
      %p398 = pneg %p66
      %p399 = pneg %p63
      %p400 = pneg %p87
      %p401 = pneg %p84
      %p402 = pneg %p108
      %p403 = pneg %p105
      %p404 = pneg %p129
      %p405 = pneg %p126
      %p406 = pneg %p150
      %p407 = pneg %p147
      %p408 = pneg %p171
      %p409 = pneg %p168
      %p410 = pneg %p192
      %p411 = pneg %p189
      %p412 = pneg %p213
      %p413 = pneg %p210
      %p414 = pneg %p234
      %p415 = pneg %p231
      %p416 = pneg %p255
      %p417 = pneg %p252
      %p418 = pneg %p276
      %p419 = pneg %p273
      %p420 = pneg %p297
      %p421 = pneg %p294
      %p422 = pneg %p323
      %p423 = pneg %p320
      %p424 = scmp.lt.s32.totalorder %s24, 1
      %s425 = scalar_select %p424, %s24, 1
      %s426 = smul.addr %s425, 8
      %s427 = scalar_lea.vmem %s13, %s426
      %p428 = scmp.lt.s32.totalorder %s24, 1
      %s429 = scalar_select %p428, %s24, 1
      %s430 = smul.addr %s429, 8
      %s431 = scalar_lea.vmem %s0, %s430
      %p432 = scmp.lt.s32.totalorder %s24, 1
      %s433 = scalar_select %p432, %s24, 1
      %s434 = smul.addr %s433, 8
      %s435 = scalar_lea.vmem %s13, %s434
      %v437 = vld [vmem:[%s431] sm:$0xff]
      %v438 = vld [vmem:[%s1] sm:$0x1]
      %v439 = vmul.f32 %v437, %v437
      %vm440 = vcmask 523264
      %v441 = vsel %vm440, %v439, 0.0
      %442 = vadd.xlane.f32.xlu0 %v441
      %v443 = vpop.xlane.xlu0 %442
      %v444 = vrcp.pop 64.0
      %v445 = vmul.f32 %v443, %v444
      %v446 = vadd.f32 %v445, 1e-06
      %v447 = vrsqrt.pop %v446
      %v448 = vmul.f32 %v437, %v447
      %v450 = vlaneseq
      %v451 = vshrl.u32 %v450, 7
      %v452 = vsub.s32 0, %v451
      %v453 = vrot.slane %v438, %v452
      %v455 = vmul.f32 %v448, %v453
      %v456 = vld [vmem:[%s2] sm:$0xff]
      %v457 = vld [vmem:[%s2 + $0x8] sm:$0xff]
      %v458 = vld [vmem:[%s2 + $0x10] sm:$0xff]
      %v459 = vld [vmem:[%s2 + $0x18] sm:$0xff]
      %v460 = vld [vmem:[%s2 + $0x20] sm:$0xff]
      %v461 = vld [vmem:[%s2 + $0x28] sm:$0xff]
      %v462 = vld [vmem:[%s2 + $0x30] sm:$0xff]
      %v463 = vld [vmem:[%s2 + $0x38] sm:$0xff]
      %v464 = vpack.c.bf16 %v455, %v455
      %v465 = vld [vmem:[%s3] sm:$0x3]
      %v467 = vlaneseq
      %v468 = vshrl.u32 %v467, 7
      %v469 = vsub.s32 0, %v468
      %v470 = vrot.slane %v465, %v469
      %v471 = vlaneseq
      %v472 = vshrl.u32 %v471, 7
      %v473 = vsub.s32 1, %v472
      %v474 = vrot.slane %v465, %v473
      %v485 = vunpack.c.l.b16 %v456
      %v486 = vunpack.c.h.b16 %v456
      %v487 = vunpack.c.l.b16 %v457
      %v488 = vunpack.c.h.b16 %v457
      %v489 = vunpack.c.l.b16 %v458
      %v490 = vunpack.c.h.b16 %v458
      %v491 = vunpack.c.l.b16 %v459
      %v492 = vunpack.c.h.b16 %v459
      %v493 = vunpack.c.l.b16 %v460
      %v494 = vunpack.c.h.b16 %v460
      %v495 = vunpack.c.l.b16 %v461
      %v496 = vunpack.c.h.b16 %v461
      %v497 = vunpack.c.l.b16 %v462
      %v498 = vunpack.c.h.b16 %v462
      %v499 = vunpack.c.l.b16 %v463
      %v500 = vunpack.c.h.b16 %v463
      %v501 = vpack.c.b16 %v487, %v485
      %v502 = vpack.c.b16 %v488, %v486
      %v503 = vpack.c.b16 %v491, %v489
      %v504 = vpack.c.b16 %v492, %v490
      %v505 = vpack.c.b16 %v495, %v493
      %v506 = vpack.c.b16 %v496, %v494
      %v507 = vpack.c.b16 %v499, %v497
      %v508 = vpack.c.b16 %v500, %v498
      %v518 = vsel %vm440, %v464, 0
      %520 = vmatprep.subr.bf16.mxu0 0
      %521 = vmatpush1.bf16.msra.mxu0 0
      %522 = vmatprep.subr.bf16.mxu0 0
      %523 = vmatpush1.bf16.msra.mxu0 0
      %524 = vmatprep.subr.bf16.mxu0 0
      %525 = vmatpush1.bf16.msra.mxu0 0
      %526 = vmatprep.subr.bf16.mxu0 0
      %527 = vmatpush1.bf16.msra.mxu0 0
      %528 = vmatprep.subr.bf16.mxu0 %v508
      %529 = vmatpush1.bf16.msra.mxu0 %v507
      %530 = vmatprep.subr.bf16.mxu0 %v506
      %531 = vmatpush1.bf16.msra.mxu0 %v505
      %532 = vmatprep.subr.bf16.mxu0 %v504
      %533 = vmatpush1.bf16.msra.mxu0 %v503
      %534 = vmatprep.subr.bf16.mxu0 %v502
      %535 = vmatpush1.bf16.msra.mxu0 %v501
      %536 = vmatprep.subr.bf16.mxu0 0
      %537 = vmatpush2.bf16.msra.mxu0 0
      %538 = vmatprep.subr.bf16.mxu0 0
      %539 = vmatpush2.bf16.msra.mxu0 0
      %540 = vmatprep.subr.bf16.mxu0 0
      %541 = vmatpush2.bf16.msra.mxu0 0
      %542 = vmatprep.subr.bf16.mxu0 0
      %543 = vmatpush2.bf16.msra.mxu0 0
      %544 = vmatprep.subr.bf16.mxu0 0
      %545 = vmatpush2.bf16.msra.mxu0 0
      %546 = vmatprep.subr.bf16.mxu0 0
      %547 = vmatpush2.bf16.msra.mxu0 0
      %548 = vmatprep.subr.bf16.mxu0 0
      %549 = vmatpush2.bf16.msra.mxu0 0
      %550 = vmatprep.subr.bf16.mxu0 0
      %551 = vmatpush2.bf16.msra.mxu0 0
      %552 = vmatprep.mubr.bf16.mxu0 0
      %553 = vmatmul.mubr.bf16.gmra.mxu0 %v518
      %v554 = vpop.f32.mrf.mxu0
      %v555 = vadd.f32 %v470, %v554
      %v556 = vpop.f32.mrf.mxu0
      %v557 = vadd.f32 %v474, %v556
      %v558 = vpop.f32.mrf.mxu0
      %v559 = vpop.f32.mrf.mxu0
      %560 = vdwg.mxu0
      %v561 = vmul.f32 %v555, 0.25
      %v562 = vpack.c.bf16 %v561, %v561
      %v563 = vpack.c.bf16 %v555, %v555
      %v564 = vpack.c.bf16 %v557, %v557
      %566 = vrot.lane.b32.xlu0 %v563, 64
      %v567 = vpop.permute.xlu0 %566
      %vm568 = vcmask 130048
      %v570 = vsel %vm568, %v562, 0
      %v573 = vsel %vm568, %v567, 0
      %575 = vmatprep.subr.bf16.mxu0 0
      %576 = vmatpush1.bf16.xpose.msra.mxu0 0
      %577 = vmatprep.subr.bf16.mxu0 0
      %578 = vmatpush1.bf16.xpose.msra.mxu0 0
      %579 = vmatprep.subr.bf16.mxu0 0
      %580 = vmatpush1.bf16.xpose.msra.mxu0 0
      %581 = vmatprep.subr.bf16.mxu0 0
      %582 = vmatpush1.bf16.xpose.msra.mxu0 0
      %583 = vmatprep.subr.bf16.mxu0 0
      %584 = vmatpush1.bf16.xpose.msra.mxu0 0
      %585 = vmatprep.subr.bf16.mxu0 0
      %586 = vmatpush1.bf16.xpose.msra.mxu0 0
      %587 = vmatprep.subr.bf16.mxu0 0
      %588 = vmatpush1.bf16.xpose.msra.mxu0 0
      %589 = vmatprep.subr.bf16.mxu0 0
      %590 = vmatpush1.bf16.xpose.msra.mxu0 %v573
      %591 = vmatprep.subr.bf16.mxu0 0
      %592 = vmatpush2.bf16.xpose.msra.mxu0 0
      %593 = vmatprep.subr.bf16.mxu0 0
      %594 = vmatpush2.bf16.xpose.msra.mxu0 0
      %595 = vmatprep.subr.bf16.mxu0 0
      %596 = vmatpush2.bf16.xpose.msra.mxu0 0
      %597 = vmatprep.subr.bf16.mxu0 0
      %598 = vmatpush2.bf16.xpose.msra.mxu0 0
      %599 = vmatprep.subr.bf16.mxu0 0
      %600 = vmatpush2.bf16.xpose.msra.mxu0 0
      %601 = vmatprep.subr.bf16.mxu0 0
      %602 = vmatpush2.bf16.xpose.msra.mxu0 0
      %603 = vmatprep.subr.bf16.mxu0 0
      %604 = vmatpush2.bf16.xpose.msra.mxu0 0
      %605 = vmatprep.subr.bf16.mxu0 0
      %606 = vmatpush2.bf16.xpose.msra.mxu0 0
      %607 = vmatprep.mubr.bf16.mxu0 0
      %608 = vmatmul.mubr.bf16.gmra.mxu0 %v570
      %v609 = vpop.f32.mrf.mxu0
      %v610 = vadd.f32 0.0, %v609
      %v611 = vpop.f32.mrf.mxu0
      %v612 = vpop.f32.mrf.mxu0
      %v613 = vpop.f32.mrf.mxu0
      %614 = vdwg.mxu0
      %vm615 = vcmask 64512
      %v616 = vsel %vm615, %v610, -inf
      %617 = vmax.xlane.f32.xlu0 %v616
      %v618 = vpop.xlane.xlu0 %617
      %v619 = vsub.f32 %v610, %v618
      %v620 = vmul.f32 %v619, 1.442695
      %v621 = vpow.pop %v620
      %v622 = vsel %vm615, %v621, 0.0
      %623 = vadd.xlane.f32.xlu0 %v622
      %v624 = vpop.xlane.xlu0 %623
      %v625 = vrcp.pop %v624
      %v626 = vmul.f32 %v621, %v625
      %v627 = vpack.c.bf16 %v626, %v626
      %v629 = vsel %vm615, %v627, 0
      %vm631 = vcmask 1043456
      %v633 = vsel %vm631, %v564, 0
      %635 = vmatprep.subr.bf16.mxu0 0
      %636 = vmatpush1.bf16.msra.mxu0 0
      %637 = vmatprep.subr.bf16.mxu0 0
      %638 = vmatpush1.bf16.msra.mxu0 0
      %639 = vmatprep.subr.bf16.mxu0 0
      %640 = vmatpush1.bf16.msra.mxu0 0
      %641 = vmatprep.subr.bf16.mxu0 0
      %642 = vmatpush1.bf16.msra.mxu0 0
      %643 = vmatprep.subr.bf16.mxu0 0
      %644 = vmatpush1.bf16.msra.mxu0 0
      %645 = vmatprep.subr.bf16.mxu0 0
      %646 = vmatpush1.bf16.msra.mxu0 0
      %647 = vmatprep.subr.bf16.mxu0 0
      %648 = vmatpush1.bf16.msra.mxu0 0
      %649 = vmatprep.subr.bf16.mxu0 0
      %650 = vmatpush1.bf16.msra.mxu0 %v633
      %651 = vmatprep.subr.bf16.mxu0 0
      %652 = vmatpush2.bf16.msra.mxu0 0
      %653 = vmatprep.subr.bf16.mxu0 0
      %654 = vmatpush2.bf16.msra.mxu0 0
      %655 = vmatprep.subr.bf16.mxu0 0
      %656 = vmatpush2.bf16.msra.mxu0 0
      %657 = vmatprep.subr.bf16.mxu0 0
      %658 = vmatpush2.bf16.msra.mxu0 0
      %659 = vmatprep.subr.bf16.mxu0 0
      %660 = vmatpush2.bf16.msra.mxu0 0
      %661 = vmatprep.subr.bf16.mxu0 0
      %662 = vmatpush2.bf16.msra.mxu0 0
      %663 = vmatprep.subr.bf16.mxu0 0
      %664 = vmatpush2.bf16.msra.mxu0 0
      %665 = vmatprep.subr.bf16.mxu0 0
      %666 = vmatpush2.bf16.msra.mxu0 0
      %667 = vmatprep.mubr.bf16.mxu0 0
      %668 = vmatmul.mubr.bf16.gmra.mxu0 %v629
      %v669 = vpop.f32.mrf.mxu0
      %v670 = vadd.f32 0.0, %v669
      %v671 = vpop.f32.mrf.mxu0
      %v672 = vpop.f32.mrf.mxu0
      %v673 = vpop.f32.mrf.mxu0
      %674 = vdwg.mxu0
      %676 = vrot.lane.b32.xlu0 %v562, 112
      %v677 = vpop.permute.xlu0 %676
      %678 = vrot.lane.b32.xlu0 %v563, 48
      %v679 = vpop.permute.xlu0 %678
      %v681 = vsel %vm568, %v677, 0
      %v684 = vsel %vm568, %v679, 0
      %686 = vmatprep.subr.bf16.mxu0 0
      %687 = vmatpush1.bf16.xpose.msra.mxu0 0
      %688 = vmatprep.subr.bf16.mxu0 0
      %689 = vmatpush1.bf16.xpose.msra.mxu0 0
      %690 = vmatprep.subr.bf16.mxu0 0
      %691 = vmatpush1.bf16.xpose.msra.mxu0 0
      %692 = vmatprep.subr.bf16.mxu0 0
      %693 = vmatpush1.bf16.xpose.msra.mxu0 0
      %694 = vmatprep.subr.bf16.mxu0 0
      %695 = vmatpush1.bf16.xpose.msra.mxu0 0
      %696 = vmatprep.subr.bf16.mxu0 0
      %697 = vmatpush1.bf16.xpose.msra.mxu0 0
      %698 = vmatprep.subr.bf16.mxu0 0
      %699 = vmatpush1.bf16.xpose.msra.mxu0 0
      %700 = vmatprep.subr.bf16.mxu0 0
      %701 = vmatpush1.bf16.xpose.msra.mxu0 %v684
      %702 = vmatprep.subr.bf16.mxu0 0
      %703 = vmatpush2.bf16.xpose.msra.mxu0 0
      %704 = vmatprep.subr.bf16.mxu0 0
      %705 = vmatpush2.bf16.xpose.msra.mxu0 0
      %706 = vmatprep.subr.bf16.mxu0 0
      %707 = vmatpush2.bf16.xpose.msra.mxu0 0
      %708 = vmatprep.subr.bf16.mxu0 0
      %709 = vmatpush2.bf16.xpose.msra.mxu0 0
      %710 = vmatprep.subr.bf16.mxu0 0
      %711 = vmatpush2.bf16.xpose.msra.mxu0 0
      %712 = vmatprep.subr.bf16.mxu0 0
      %713 = vmatpush2.bf16.xpose.msra.mxu0 0
      %714 = vmatprep.subr.bf16.mxu0 0
      %715 = vmatpush2.bf16.xpose.msra.mxu0 0
      %716 = vmatprep.subr.bf16.mxu0 0
      %717 = vmatpush2.bf16.xpose.msra.mxu0 0
      %718 = vmatprep.mubr.bf16.mxu0 0
      %719 = vmatmul.mubr.bf16.gmra.mxu0 %v681
      %v720 = vpop.f32.mrf.mxu0
      %v721 = vadd.f32 0.0, %v720
      %v722 = vpop.f32.mrf.mxu0
      %v723 = vpop.f32.mrf.mxu0
      %v724 = vpop.f32.mrf.mxu0
      %725 = vdwg.mxu0
      %v726 = vsel %vm615, %v721, -inf
      %727 = vmax.xlane.f32.xlu0 %v726
      %v728 = vpop.xlane.xlu0 %727
      %v729 = vsub.f32 %v721, %v728
      %v730 = vmul.f32 %v729, 1.442695
      %v731 = vpow.pop %v730
      %v732 = vsel %vm615, %v731, 0.0
      %733 = vadd.xlane.f32.xlu0 %v732
      %v734 = vpop.xlane.xlu0 %733
      %v735 = vrcp.pop %v734
      %v736 = vmul.f32 %v731, %v735
      %v737 = vpack.c.bf16 %v736, %v736
      %739 = vrot.lane.b32.xlu0 %v564, 112
      %v740 = vpop.permute.xlu0 %739
      %v742 = vsel %vm615, %v737, 0
      %v745 = vsel %vm631, %v740, 0
      %747 = vmatprep.subr.bf16.mxu0 0
      %748 = vmatpush1.bf16.msra.mxu0 0
      %749 = vmatprep.subr.bf16.mxu0 0
      %750 = vmatpush1.bf16.msra.mxu0 0
      %751 = vmatprep.subr.bf16.mxu0 0
      %752 = vmatpush1.bf16.msra.mxu0 0
      %753 = vmatprep.subr.bf16.mxu0 0
      %754 = vmatpush1.bf16.msra.mxu0 0
      %755 = vmatprep.subr.bf16.mxu0 0
      %756 = vmatpush1.bf16.msra.mxu0 0
      %757 = vmatprep.subr.bf16.mxu0 0
      %758 = vmatpush1.bf16.msra.mxu0 0
      %759 = vmatprep.subr.bf16.mxu0 0
      %760 = vmatpush1.bf16.msra.mxu0 0
      %761 = vmatprep.subr.bf16.mxu0 0
      %762 = vmatpush1.bf16.msra.mxu0 %v745
      %763 = vmatprep.subr.bf16.mxu0 0
      %764 = vmatpush2.bf16.msra.mxu0 0
      %765 = vmatprep.subr.bf16.mxu0 0
      %766 = vmatpush2.bf16.msra.mxu0 0
      %767 = vmatprep.subr.bf16.mxu0 0
      %768 = vmatpush2.bf16.msra.mxu0 0
      %769 = vmatprep.subr.bf16.mxu0 0
      %770 = vmatpush2.bf16.msra.mxu0 0
      %771 = vmatprep.subr.bf16.mxu0 0
      %772 = vmatpush2.bf16.msra.mxu0 0
      %773 = vmatprep.subr.bf16.mxu0 0
      %774 = vmatpush2.bf16.msra.mxu0 0
      %775 = vmatprep.subr.bf16.mxu0 0
      %776 = vmatpush2.bf16.msra.mxu0 0
      %777 = vmatprep.subr.bf16.mxu0 0
      %778 = vmatpush2.bf16.msra.mxu0 0
      %779 = vmatprep.mubr.bf16.mxu0 0
      %780 = vmatmul.mubr.bf16.gmra.mxu0 %v742
      %v781 = vpop.f32.mrf.mxu0
      %v782 = vadd.f32 0.0, %v781
      %v783 = vpop.f32.mrf.mxu0
      %v784 = vpop.f32.mrf.mxu0
      %v785 = vpop.f32.mrf.mxu0
      %786 = vdwg.mxu0
      %787 = vrot.lane.b32.xlu0 %v562, 96
      %v788 = vpop.permute.xlu0 %787
      %789 = vrot.lane.b32.xlu0 %v563, 32
      %v790 = vpop.permute.xlu0 %789
      %v792 = vsel %vm568, %v788, 0
      %v795 = vsel %vm568, %v790, 0
      %797 = vmatprep.subr.bf16.mxu0 0
      %798 = vmatpush1.bf16.xpose.msra.mxu0 0
      %799 = vmatprep.subr.bf16.mxu0 0
      %800 = vmatpush1.bf16.xpose.msra.mxu0 0
      %801 = vmatprep.subr.bf16.mxu0 0
      %802 = vmatpush1.bf16.xpose.msra.mxu0 0
      %803 = vmatprep.subr.bf16.mxu0 0
      %804 = vmatpush1.bf16.xpose.msra.mxu0 0
      %805 = vmatprep.subr.bf16.mxu0 0
      %806 = vmatpush1.bf16.xpose.msra.mxu0 0
      %807 = vmatprep.subr.bf16.mxu0 0
      %808 = vmatpush1.bf16.xpose.msra.mxu0 0
      %809 = vmatprep.subr.bf16.mxu0 0
      %810 = vmatpush1.bf16.xpose.msra.mxu0 0
      %811 = vmatprep.subr.bf16.mxu0 0
      %812 = vmatpush1.bf16.xpose.msra.mxu0 %v795
      %813 = vmatprep.subr.bf16.mxu0 0
      %814 = vmatpush2.bf16.xpose.msra.mxu0 0
      %815 = vmatprep.subr.bf16.mxu0 0
      %816 = vmatpush2.bf16.xpose.msra.mxu0 0
      %817 = vmatprep.subr.bf16.mxu0 0
      %818 = vmatpush2.bf16.xpose.msra.mxu0 0
      %819 = vmatprep.subr.bf16.mxu0 0
      %820 = vmatpush2.bf16.xpose.msra.mxu0 0
      %821 = vmatprep.subr.bf16.mxu0 0
      %822 = vmatpush2.bf16.xpose.msra.mxu0 0
      %823 = vmatprep.subr.bf16.mxu0 0
      %824 = vmatpush2.bf16.xpose.msra.mxu0 0
      %825 = vmatprep.subr.bf16.mxu0 0
      %826 = vmatpush2.bf16.xpose.msra.mxu0 0
      %827 = vmatprep.subr.bf16.mxu0 0
      %828 = vmatpush2.bf16.xpose.msra.mxu0 0
      %829 = vmatprep.mubr.bf16.mxu0 0
      %830 = vmatmul.mubr.bf16.gmra.mxu0 %v792
      %v831 = vpop.f32.mrf.mxu0
      %v832 = vadd.f32 0.0, %v831
      %v833 = vpop.f32.mrf.mxu0
      %v834 = vpop.f32.mrf.mxu0
      %v835 = vpop.f32.mrf.mxu0
      %836 = vdwg.mxu0
      %v837 = vsel %vm615, %v832, -inf
      %838 = vmax.xlane.f32.xlu0 %v837
      %v839 = vpop.xlane.xlu0 %838
      %v840 = vsub.f32 %v832, %v839
      %v841 = vmul.f32 %v840, 1.442695
      %v842 = vpow.pop %v841
      %v843 = vsel %vm615, %v842, 0.0
      %844 = vadd.xlane.f32.xlu0 %v843
      %v845 = vpop.xlane.xlu0 %844
      %v846 = vrcp.pop %v845
      %v847 = vmul.f32 %v842, %v846
      %v848 = vpack.c.bf16 %v847, %v847
      %849 = vrot.lane.b32.xlu0 %v564, 96
      %v850 = vpop.permute.xlu0 %849
      %v852 = vsel %vm615, %v848, 0
      %v855 = vsel %vm631, %v850, 0
      %857 = vmatprep.subr.bf16.mxu0 0
      %858 = vmatpush1.bf16.msra.mxu0 0
      %859 = vmatprep.subr.bf16.mxu0 0
      %860 = vmatpush1.bf16.msra.mxu0 0
      %861 = vmatprep.subr.bf16.mxu0 0
      %862 = vmatpush1.bf16.msra.mxu0 0
      %863 = vmatprep.subr.bf16.mxu0 0
      %864 = vmatpush1.bf16.msra.mxu0 0
      %865 = vmatprep.subr.bf16.mxu0 0
      %866 = vmatpush1.bf16.msra.mxu0 0
      %867 = vmatprep.subr.bf16.mxu0 0
      %868 = vmatpush1.bf16.msra.mxu0 0
      %869 = vmatprep.subr.bf16.mxu0 0
      %870 = vmatpush1.bf16.msra.mxu0 0
      %871 = vmatprep.subr.bf16.mxu0 0
      %872 = vmatpush1.bf16.msra.mxu0 %v855
      %873 = vmatprep.subr.bf16.mxu0 0
      %874 = vmatpush2.bf16.msra.mxu0 0
      %875 = vmatprep.subr.bf16.mxu0 0
      %876 = vmatpush2.bf16.msra.mxu0 0
      %877 = vmatprep.subr.bf16.mxu0 0
      %878 = vmatpush2.bf16.msra.mxu0 0
      %879 = vmatprep.subr.bf16.mxu0 0
      %880 = vmatpush2.bf16.msra.mxu0 0
      %881 = vmatprep.subr.bf16.mxu0 0
      %882 = vmatpush2.bf16.msra.mxu0 0
      %883 = vmatprep.subr.bf16.mxu0 0
      %884 = vmatpush2.bf16.msra.mxu0 0
      %885 = vmatprep.subr.bf16.mxu0 0
      %886 = vmatpush2.bf16.msra.mxu0 0
      %887 = vmatprep.subr.bf16.mxu0 0
      %888 = vmatpush2.bf16.msra.mxu0 0
      %889 = vmatprep.mubr.bf16.mxu0 0
      %890 = vmatmul.mubr.bf16.gmra.mxu0 %v852
      %v891 = vpop.f32.mrf.mxu0
      %v892 = vadd.f32 0.0, %v891
      %v893 = vpop.f32.mrf.mxu0
      %v894 = vpop.f32.mrf.mxu0
      %v895 = vpop.f32.mrf.mxu0
      %896 = vdwg.mxu0
      %897 = vrot.lane.b32.xlu0 %v562, 80
      %v898 = vpop.permute.xlu0 %897
      %899 = vrot.lane.b32.xlu0 %v563, 16
      %v900 = vpop.permute.xlu0 %899
      %v902 = vsel %vm568, %v898, 0
      %v905 = vsel %vm568, %v900, 0
      %907 = vmatprep.subr.bf16.mxu0 0
      %908 = vmatpush1.bf16.xpose.msra.mxu0 0
      %909 = vmatprep.subr.bf16.mxu0 0
      %910 = vmatpush1.bf16.xpose.msra.mxu0 0
      %911 = vmatprep.subr.bf16.mxu0 0
      %912 = vmatpush1.bf16.xpose.msra.mxu0 0
      %913 = vmatprep.subr.bf16.mxu0 0
      %914 = vmatpush1.bf16.xpose.msra.mxu0 0
      %915 = vmatprep.subr.bf16.mxu0 0
      %916 = vmatpush1.bf16.xpose.msra.mxu0 0
      %917 = vmatprep.subr.bf16.mxu0 0
      %918 = vmatpush1.bf16.xpose.msra.mxu0 0
      %919 = vmatprep.subr.bf16.mxu0 0
      %920 = vmatpush1.bf16.xpose.msra.mxu0 0
      %921 = vmatprep.subr.bf16.mxu0 0
      %922 = vmatpush1.bf16.xpose.msra.mxu0 %v905
      %923 = vmatprep.subr.bf16.mxu0 0
      %924 = vmatpush2.bf16.xpose.msra.mxu0 0
      %925 = vmatprep.subr.bf16.mxu0 0
      %926 = vmatpush2.bf16.xpose.msra.mxu0 0
      %927 = vmatprep.subr.bf16.mxu0 0
      %928 = vmatpush2.bf16.xpose.msra.mxu0 0
      %929 = vmatprep.subr.bf16.mxu0 0
      %930 = vmatpush2.bf16.xpose.msra.mxu0 0
      %931 = vmatprep.subr.bf16.mxu0 0
      %932 = vmatpush2.bf16.xpose.msra.mxu0 0
      %933 = vmatprep.subr.bf16.mxu0 0
      %934 = vmatpush2.bf16.xpose.msra.mxu0 0
      %935 = vmatprep.subr.bf16.mxu0 0
      %936 = vmatpush2.bf16.xpose.msra.mxu0 0
      %937 = vmatprep.subr.bf16.mxu0 0
      %938 = vmatpush2.bf16.xpose.msra.mxu0 0
      %939 = vmatprep.mubr.bf16.mxu0 0
      %940 = vmatmul.mubr.bf16.gmra.mxu0 %v902
      %v941 = vpop.f32.mrf.mxu0
      %v942 = vadd.f32 0.0, %v941
      %v943 = vpop.f32.mrf.mxu0
      %v944 = vpop.f32.mrf.mxu0
      %v945 = vpop.f32.mrf.mxu0
      %946 = vdwg.mxu0
      %v947 = vsel %vm615, %v942, -inf
      %948 = vmax.xlane.f32.xlu0 %v947
      %v949 = vpop.xlane.xlu0 %948
      %v950 = vsub.f32 %v942, %v949
      %v951 = vmul.f32 %v950, 1.442695
      %v952 = vpow.pop %v951
      %v953 = vsel %vm615, %v952, 0.0
      %954 = vadd.xlane.f32.xlu0 %v953
      %v955 = vpop.xlane.xlu0 %954
      %v956 = vrcp.pop %v955
      %v957 = vmul.f32 %v952, %v956
      %v958 = vpack.c.bf16 %v957, %v957
      %959 = vrot.lane.b32.xlu0 %v564, 80
      %v960 = vpop.permute.xlu0 %959
      %v962 = vsel %vm615, %v958, 0
      %v965 = vsel %vm631, %v960, 0
      %967 = vmatprep.subr.bf16.mxu0 0
      %968 = vmatpush1.bf16.msra.mxu0 0
      %969 = vmatprep.subr.bf16.mxu0 0
      %970 = vmatpush1.bf16.msra.mxu0 0
      %971 = vmatprep.subr.bf16.mxu0 0
      %972 = vmatpush1.bf16.msra.mxu0 0
      %973 = vmatprep.subr.bf16.mxu0 0
      %974 = vmatpush1.bf16.msra.mxu0 0
      %975 = vmatprep.subr.bf16.mxu0 0
      %976 = vmatpush1.bf16.msra.mxu0 0
      %977 = vmatprep.subr.bf16.mxu0 0
      %978 = vmatpush1.bf16.msra.mxu0 0
      %979 = vmatprep.subr.bf16.mxu0 0
      %980 = vmatpush1.bf16.msra.mxu0 0
      %981 = vmatprep.subr.bf16.mxu0 0
      %982 = vmatpush1.bf16.msra.mxu0 %v965
      %983 = vmatprep.subr.bf16.mxu0 0
      %984 = vmatpush2.bf16.msra.mxu0 0
      %985 = vmatprep.subr.bf16.mxu0 0
      %986 = vmatpush2.bf16.msra.mxu0 0
      %987 = vmatprep.subr.bf16.mxu0 0
      %988 = vmatpush2.bf16.msra.mxu0 0
      %989 = vmatprep.subr.bf16.mxu0 0
      %990 = vmatpush2.bf16.msra.mxu0 0
      %991 = vmatprep.subr.bf16.mxu0 0
      %992 = vmatpush2.bf16.msra.mxu0 0
      %993 = vmatprep.subr.bf16.mxu0 0
      %994 = vmatpush2.bf16.msra.mxu0 0
      %995 = vmatprep.subr.bf16.mxu0 0
      %996 = vmatpush2.bf16.msra.mxu0 0
      %997 = vmatprep.subr.bf16.mxu0 0
      %998 = vmatpush2.bf16.msra.mxu0 0
      %999 = vmatprep.mubr.bf16.mxu0 0
      %1000 = vmatmul.mubr.bf16.gmra.mxu0 %v962
      %v1001 = vpop.f32.mrf.mxu0
      %v1002 = vadd.f32 0.0, %v1001
      %v1003 = vpop.f32.mrf.mxu0
      %v1004 = vpop.f32.mrf.mxu0
      %v1005 = vpop.f32.mrf.mxu0
      %1006 = vdwg.mxu0
      %1008 = vrot.lane.b32.xlu0 %v782, 16
      %v1009 = vpop.permute.xlu0 %1008
      %1012 = vrot.lane.b32.xlu0 %v892, 32
      %v1013 = vpop.permute.xlu0 %1012
      %1016 = vrot.lane.b32.xlu0 %v1002, 48
      %v1017 = vpop.permute.xlu0 %1016
      %v1019 = vsel %vm568, %v670, %v1009
      %vm1020 = vcmask 261120
      %v1021 = vsel %vm1020, %v1019, %v1013
      %vm1022 = vcmask 392192
      %v1023 = vsel %vm1022, %v1021, %v1017
      %v1024 = vld [vmem:[%s4] sm:$0xf]
      %v1025 = vld [vmem:[%s4 + $0x4] sm:$0xf]
      %v1026 = vld [vmem:[%s4 + $0x8] sm:$0xf]
      %v1027 = vld [vmem:[%s4 + $0xc] sm:$0xf]
      %v1028 = vld [vmem:[%s4 + $0x10] sm:$0xf]
      %v1029 = vld [vmem:[%s4 + $0x14] sm:$0xf]
      %v1030 = vld [vmem:[%s4 + $0x18] sm:$0xf]
      %v1031 = vld [vmem:[%s4 + $0x1c] sm:$0xf]
      %v1032 = vpack.c.bf16 %v1023, %v1023
      %v1041 = vunpack.c.l.b16 %v1024
      %v1042 = vunpack.c.l.b16 %v1025
      %v1043 = vunpack.c.l.b16 %v1026
      %v1044 = vunpack.c.l.b16 %v1027
      %v1045 = vunpack.c.l.b16 %v1028
      %v1046 = vunpack.c.l.b16 %v1029
      %v1047 = vunpack.c.l.b16 %v1030
      %v1048 = vunpack.c.l.b16 %v1031
      %v1049 = vpack.c.b16 %v1042, %v1041
      %v1050 = vpack.c.b16 %v1044, %v1043
      %v1051 = vpack.c.b16 %v1046, %v1045
      %v1052 = vpack.c.b16 %v1048, %v1047
      %v1058 = vsel %vm440, %v1032, 0
      %1060 = vmatprep.subr.bf16.mxu0 0
      %1061 = vmatpush1.bf16.msra.mxu0 0
      %1062 = vmatprep.subr.bf16.mxu0 0
      %1063 = vmatpush1.bf16.msra.mxu0 0
      %1064 = vmatprep.subr.bf16.mxu0 0
      %1065 = vmatpush1.bf16.msra.mxu0 0
      %1066 = vmatprep.subr.bf16.mxu0 0
      %1067 = vmatpush1.bf16.msra.mxu0 0
      %1068 = vmatprep.subr.bf16.mxu0 0
      %1069 = vmatpush1.bf16.msra.mxu0 %v1052
      %1070 = vmatprep.subr.bf16.mxu0 0
      %1071 = vmatpush1.bf16.msra.mxu0 %v1051
      %1072 = vmatprep.subr.bf16.mxu0 0
      %1073 = vmatpush1.bf16.msra.mxu0 %v1050
      %1074 = vmatprep.subr.bf16.mxu0 0
      %1075 = vmatpush1.bf16.msra.mxu0 %v1049
      %1076 = vmatprep.subr.bf16.mxu0 0
      %1077 = vmatpush2.bf16.msra.mxu0 0
      %1078 = vmatprep.subr.bf16.mxu0 0
      %1079 = vmatpush2.bf16.msra.mxu0 0
      %1080 = vmatprep.subr.bf16.mxu0 0
      %1081 = vmatpush2.bf16.msra.mxu0 0
      %1082 = vmatprep.subr.bf16.mxu0 0
      %1083 = vmatpush2.bf16.msra.mxu0 0
      %1084 = vmatprep.subr.bf16.mxu0 0
      %1085 = vmatpush2.bf16.msra.mxu0 0
      %1086 = vmatprep.subr.bf16.mxu0 0
      %1087 = vmatpush2.bf16.msra.mxu0 0
      %1088 = vmatprep.subr.bf16.mxu0 0
      %1089 = vmatpush2.bf16.msra.mxu0 0
      %1090 = vmatprep.subr.bf16.mxu0 0
      %1091 = vmatpush2.bf16.msra.mxu0 0
      %1092 = vmatprep.mubr.bf16.mxu0 0
      %1093 = vmatmul.mubr.bf16.gmra.mxu0 %v1058
      %v1094 = vpop.f32.mrf.mxu0
      %v1095 = vadd.f32 0.0, %v1094
      %v1096 = vpop.f32.mrf.mxu0
      %v1097 = vpop.f32.mrf.mxu0
      %v1098 = vpop.f32.mrf.mxu0
      %1099 = vdwg.mxu0
      %v1100 = vadd.f32 %v437, %v1095
      %v1101 = vld [vmem:[%s5] sm:$0x1]
      %v1103 = vlaneseq
      %v1104 = vshrl.u32 %v1103, 7
      %v1105 = vsub.s32 0, %v1104
      %v1106 = vrot.slane %v1101, %v1105
      %v1108 = vadd.f32 %v1100, %v1106
      %v1109 = vld [vmem:[%s6] sm:$0x1]
      %v1110 = vmul.f32 %v1108, %v1108
      %v1111 = vsel %vm440, %v1110, 0.0
      %1112 = vadd.xlane.f32.xlu0 %v1111
      %v1113 = vpop.xlane.xlu0 %1112
      %v1114 = vmul.f32 %v1113, %v444
      %v1115 = vadd.f32 %v1114, 1e-06
      %v1116 = vrsqrt.pop %v1115
      %v1117 = vmul.f32 %v1108, %v1116
      %v1119 = vlaneseq
      %v1120 = vshrl.u32 %v1119, 7
      %v1121 = vsub.s32 0, %v1120
      %v1122 = vrot.slane %v1109, %v1121
      %v1124 = vmul.f32 %v1117, %v1122
      %v1125 = vld [vmem:[%s7] sm:$0xf]
      %v1126 = vld [vmem:[%s7 + $0x4] sm:$0xf]
      %v1127 = vld [vmem:[%s7 + $0x8] sm:$0xf]
      %v1128 = vld [vmem:[%s7 + $0xc] sm:$0xf]
      %v1129 = vld [vmem:[%s7 + $0x10] sm:$0xf]
      %v1130 = vld [vmem:[%s7 + $0x14] sm:$0xf]
      %v1131 = vld [vmem:[%s7 + $0x18] sm:$0xf]
      %v1132 = vld [vmem:[%s7 + $0x1c] sm:$0xf]
      %v1133 = vpack.c.bf16 %v1124, %v1124
      %v1134 = vld [vmem:[%s8] sm:$0x1]
      %v1136 = vlaneseq
      %v1137 = vshrl.u32 %v1136, 7
      %v1138 = vsub.s32 0, %v1137
      %v1139 = vrot.slane %v1134, %v1138
      %v1149 = vunpack.c.l.b16 %v1125
      %v1150 = vunpack.c.l.b16 %v1126
      %v1151 = vunpack.c.l.b16 %v1127
      %v1152 = vunpack.c.l.b16 %v1128
      %v1153 = vunpack.c.l.b16 %v1129
      %v1154 = vunpack.c.l.b16 %v1130
      %v1155 = vunpack.c.l.b16 %v1131
      %v1156 = vunpack.c.l.b16 %v1132
      %v1157 = vpack.c.b16 %v1150, %v1149
      %v1158 = vpack.c.b16 %v1152, %v1151
      %v1159 = vpack.c.b16 %v1154, %v1153
      %v1160 = vpack.c.b16 %v1156, %v1155
      %v1166 = vsel %vm440, %v1133, 0
      %1168 = vmatprep.subr.bf16.mxu0 0
      %1169 = vmatpush1.bf16.msra.mxu0 0
      %1170 = vmatprep.subr.bf16.mxu0 0
      %1171 = vmatpush1.bf16.msra.mxu0 0
      %1172 = vmatprep.subr.bf16.mxu0 0
      %1173 = vmatpush1.bf16.msra.mxu0 0
      %1174 = vmatprep.subr.bf16.mxu0 0
      %1175 = vmatpush1.bf16.msra.mxu0 0
      %1176 = vmatprep.subr.bf16.mxu0 0
      %1177 = vmatpush1.bf16.msra.mxu0 %v1160
      %1178 = vmatprep.subr.bf16.mxu0 0
      %1179 = vmatpush1.bf16.msra.mxu0 %v1159
      %1180 = vmatprep.subr.bf16.mxu0 0
      %1181 = vmatpush1.bf16.msra.mxu0 %v1158
      %1182 = vmatprep.subr.bf16.mxu0 0
      %1183 = vmatpush1.bf16.msra.mxu0 %v1157
      %1184 = vmatprep.subr.bf16.mxu0 0
      %1185 = vmatpush2.bf16.msra.mxu0 0
      %1186 = vmatprep.subr.bf16.mxu0 0
      %1187 = vmatpush2.bf16.msra.mxu0 0
      %1188 = vmatprep.subr.bf16.mxu0 0
      %1189 = vmatpush2.bf16.msra.mxu0 0
      %1190 = vmatprep.subr.bf16.mxu0 0
      %1191 = vmatpush2.bf16.msra.mxu0 0
      %1192 = vmatprep.subr.bf16.mxu0 0
      %1193 = vmatpush2.bf16.msra.mxu0 0
      %1194 = vmatprep.subr.bf16.mxu0 0
      %1195 = vmatpush2.bf16.msra.mxu0 0
      %1196 = vmatprep.subr.bf16.mxu0 0
      %1197 = vmatpush2.bf16.msra.mxu0 0
      %1198 = vmatprep.subr.bf16.mxu0 0
      %1199 = vmatpush2.bf16.msra.mxu0 0
      %1200 = vmatprep.mubr.bf16.mxu0 0
      %1201 = vmatmul.mubr.bf16.gmra.mxu0 %v1166
      %v1202 = vpop.f32.mrf.mxu0
      %v1203 = vadd.f32 %v1139, %v1202
      %v1204 = vpop.f32.mrf.mxu0
      %v1205 = vpop.f32.mrf.mxu0
      %v1206 = vpop.f32.mrf.mxu0
      %1207 = vdwg.mxu0
      %v1208 = vmul.f32 %v1124, %v1203
      %1210 = vrot.lane.b32.xlu0 %v1203, 64
      %v1211 = vpop.permute.xlu0 %1210
      %v1213 = vadd.f32 %v1208, %v1211
      %v1214 = vld [vmem:[%s9] sm:$0xff]
      %v1215 = vld [vmem:[%s9 + $0x8] sm:$0xff]
      %v1216 = vld [vmem:[%s9 + $0x10] sm:$0xff]
      %v1217 = vld [vmem:[%s9 + $0x18] sm:$0xff]
      %v1218 = vld [vmem:[%s9 + $0x20] sm:$0xff]
      %v1219 = vld [vmem:[%s9 + $0x28] sm:$0xff]
      %v1220 = vld [vmem:[%s9 + $0x30] sm:$0xff]
      %v1221 = vld [vmem:[%s9 + $0x38] sm:$0xff]
      %v1222 = vpack.c.bf16 %v1213, %v1213
      %v1223 = vld [vmem:[%s10] sm:$0x3]
      %v1225 = vlaneseq
      %v1226 = vshrl.u32 %v1225, 7
      %v1227 = vsub.s32 0, %v1226
      %v1228 = vrot.slane %v1223, %v1227
      %v1229 = vlaneseq
      %v1230 = vshrl.u32 %v1229, 7
      %v1231 = vsub.s32 1, %v1230
      %v1232 = vrot.slane %v1223, %v1231
      %v1243 = vunpack.c.l.b16 %v1214
      %v1244 = vunpack.c.h.b16 %v1214
      %v1245 = vunpack.c.l.b16 %v1215
      %v1246 = vunpack.c.h.b16 %v1215
      %v1247 = vunpack.c.l.b16 %v1216
      %v1248 = vunpack.c.h.b16 %v1216
      %v1249 = vunpack.c.l.b16 %v1217
      %v1250 = vunpack.c.h.b16 %v1217
      %v1251 = vunpack.c.l.b16 %v1218
      %v1252 = vunpack.c.h.b16 %v1218
      %v1253 = vunpack.c.l.b16 %v1219
      %v1254 = vunpack.c.h.b16 %v1219
      %v1255 = vunpack.c.l.b16 %v1220
      %v1256 = vunpack.c.h.b16 %v1220
      %v1257 = vunpack.c.l.b16 %v1221
      %v1258 = vunpack.c.h.b16 %v1221
      %v1259 = vpack.c.b16 %v1245, %v1243
      %v1260 = vpack.c.b16 %v1246, %v1244
      %v1261 = vpack.c.b16 %v1249, %v1247
      %v1262 = vpack.c.b16 %v1250, %v1248
      %v1263 = vpack.c.b16 %v1253, %v1251
      %v1264 = vpack.c.b16 %v1254, %v1252
      %v1265 = vpack.c.b16 %v1257, %v1255
      %v1266 = vpack.c.b16 %v1258, %v1256
      %v1276 = vsel %vm440, %v1222, 0
      %1278 = vmatprep.subr.bf16.mxu0 0
      %1279 = vmatpush1.bf16.msra.mxu0 0
      %1280 = vmatprep.subr.bf16.mxu0 0
      %1281 = vmatpush1.bf16.msra.mxu0 0
      %1282 = vmatprep.subr.bf16.mxu0 0
      %1283 = vmatpush1.bf16.msra.mxu0 0
      %1284 = vmatprep.subr.bf16.mxu0 0
      %1285 = vmatpush1.bf16.msra.mxu0 0
      %1286 = vmatprep.subr.bf16.mxu0 %v1266
      %1287 = vmatpush1.bf16.msra.mxu0 %v1265
      %1288 = vmatprep.subr.bf16.mxu0 %v1264
      %1289 = vmatpush1.bf16.msra.mxu0 %v1263
      %1290 = vmatprep.subr.bf16.mxu0 %v1262
      %1291 = vmatpush1.bf16.msra.mxu0 %v1261
      %1292 = vmatprep.subr.bf16.mxu0 %v1260
      %1293 = vmatpush1.bf16.msra.mxu0 %v1259
      %1294 = vmatprep.subr.bf16.mxu0 0
      %1295 = vmatpush2.bf16.msra.mxu0 0
      %1296 = vmatprep.subr.bf16.mxu0 0
      %1297 = vmatpush2.bf16.msra.mxu0 0
      %1298 = vmatprep.subr.bf16.mxu0 0
      %1299 = vmatpush2.bf16.msra.mxu0 0
      %1300 = vmatprep.subr.bf16.mxu0 0
      %1301 = vmatpush2.bf16.msra.mxu0 0
      %1302 = vmatprep.subr.bf16.mxu0 0
      %1303 = vmatpush2.bf16.msra.mxu0 0
      %1304 = vmatprep.subr.bf16.mxu0 0
      %1305 = vmatpush2.bf16.msra.mxu0 0
      %1306 = vmatprep.subr.bf16.mxu0 0
      %1307 = vmatpush2.bf16.msra.mxu0 0
      %1308 = vmatprep.subr.bf16.mxu0 0
      %1309 = vmatpush2.bf16.msra.mxu0 0
      %1310 = vmatprep.mubr.bf16.mxu0 0
      %1311 = vmatmul.mubr.bf16.gmra.mxu0 %v1276
      %v1312 = vpop.f32.mrf.mxu0
      %v1313 = vadd.f32 %v1228, %v1312
      %v1314 = vpop.f32.mrf.mxu0
      %v1315 = vadd.f32 %v1232, %v1314
      %v1316 = vpop.f32.mrf.mxu0
      %v1317 = vpop.f32.mrf.mxu0
      %1318 = vdwg.mxu0
      %v1319 = vmul.f32 %v1313, %v1313
      %v1320 = vmul.f32 %v1315, %v1315
      %v1321 = vmul.f32 %v1313, %v1319
      %v1322 = vmul.f32 %v1315, %v1320
      %v1323 = vmul.f32 %v1321, 0.044715
      %v1324 = vmul.f32 %v1322, 0.044715
      %v1325 = vadd.f32 %v1313, %v1323
      %v1326 = vadd.f32 %v1315, %v1324
      %v1327 = vmul.f32 %v1325, 0.7978846
      %v1328 = vmul.f32 %v1326, 0.7978846
      %v1329 = vtanh.pop %v1327
      %v1330 = vtanh.pop %v1328
      %v1331 = vadd.f32 %v1329, 1.0
      %v1332 = vadd.f32 %v1330, 1.0
      %v1333 = vmul.f32 %v1331, 0.5
      %v1334 = vmul.f32 %v1332, 0.5
      %v1335 = vmul.f32 %v1313, %v1333
      %v1336 = vmul.f32 %v1315, %v1334
      %v1337 = vld [vmem:[%s11] sm:$0xf]
      %v1338 = vld [vmem:[%s11 + $0x4] sm:$0xf]
      %v1339 = vld [vmem:[%s11 + $0x8] sm:$0xf]
      %v1340 = vld [vmem:[%s11 + $0xc] sm:$0xf]
      %v1341 = vld [vmem:[%s11 + $0x10] sm:$0xf]
      %v1342 = vld [vmem:[%s11 + $0x14] sm:$0xf]
      %v1343 = vld [vmem:[%s11 + $0x18] sm:$0xf]
      %v1344 = vld [vmem:[%s11 + $0x1c] sm:$0xf]
      %v1345 = vld [vmem:[%s11 + $0x20] sm:$0xf]
      %v1346 = vld [vmem:[%s11 + $0x24] sm:$0xf]
      %v1347 = vld [vmem:[%s11 + $0x28] sm:$0xf]
      %v1348 = vld [vmem:[%s11 + $0x2c] sm:$0xf]
      %v1349 = vld [vmem:[%s11 + $0x30] sm:$0xf]
      %v1350 = vld [vmem:[%s11 + $0x34] sm:$0xf]
      %v1351 = vld [vmem:[%s11 + $0x38] sm:$0xf]
      %v1352 = vld [vmem:[%s11 + $0x3c] sm:$0xf]
      %v1353 = vld [vmem:[%s11 + $0x40] sm:$0xf]
      %v1354 = vld [vmem:[%s11 + $0x44] sm:$0xf]
      %v1355 = vld [vmem:[%s11 + $0x48] sm:$0xf]
      %v1356 = vld [vmem:[%s11 + $0x4c] sm:$0xf]
      %v1357 = vld [vmem:[%s11 + $0x50] sm:$0xf]
      %v1358 = vld [vmem:[%s11 + $0x54] sm:$0xf]
      %v1359 = vld [vmem:[%s11 + $0x58] sm:$0xf]
      %v1360 = vld [vmem:[%s11 + $0x5c] sm:$0xf]
      %v1361 = vld [vmem:[%s11 + $0x60] sm:$0xf]
      %v1362 = vld [vmem:[%s11 + $0x64] sm:$0xf]
      %v1363 = vld [vmem:[%s11 + $0x68] sm:$0xf]
      %v1364 = vld [vmem:[%s11 + $0x6c] sm:$0xf]
      %v1365 = vld [vmem:[%s11 + $0x70] sm:$0xf]
      %v1366 = vld [vmem:[%s11 + $0x74] sm:$0xf]
      %v1367 = vld [vmem:[%s11 + $0x78] sm:$0xf]
      %v1368 = vld [vmem:[%s11 + $0x7c] sm:$0xf]
      %v1369 = vpack.c.bf16 %v1335, %v1335
      %v1370 = vpack.c.bf16 %v1336, %v1336
      %v1371 = vld [vmem:[%s12] sm:$0x1]
      %v1373 = vlaneseq
      %v1374 = vshrl.u32 %v1373, 7
      %v1375 = vsub.s32 0, %v1374
      %v1376 = vrot.slane %v1371, %v1375
      %v1410 = vunpack.c.l.b16 %v1337
      %v1411 = vunpack.c.l.b16 %v1338
      %v1412 = vunpack.c.l.b16 %v1339
      %v1413 = vunpack.c.l.b16 %v1340
      %v1414 = vunpack.c.l.b16 %v1341
      %v1415 = vunpack.c.l.b16 %v1342
      %v1416 = vunpack.c.l.b16 %v1343
      %v1417 = vunpack.c.l.b16 %v1344
      %v1418 = vunpack.c.l.b16 %v1345
      %v1419 = vunpack.c.l.b16 %v1346
      %v1420 = vunpack.c.l.b16 %v1347
      %v1421 = vunpack.c.l.b16 %v1348
      %v1422 = vunpack.c.l.b16 %v1349
      %v1423 = vunpack.c.l.b16 %v1350
      %v1424 = vunpack.c.l.b16 %v1351
      %v1425 = vunpack.c.l.b16 %v1352
      %v1426 = vunpack.c.l.b16 %v1353
      %v1427 = vunpack.c.l.b16 %v1354
      %v1428 = vunpack.c.l.b16 %v1355
      %v1429 = vunpack.c.l.b16 %v1356
      %v1430 = vunpack.c.l.b16 %v1357
      %v1431 = vunpack.c.l.b16 %v1358
      %v1432 = vunpack.c.l.b16 %v1359
      %v1433 = vunpack.c.l.b16 %v1360
      %v1434 = vunpack.c.l.b16 %v1361
      %v1435 = vunpack.c.l.b16 %v1362
      %v1436 = vunpack.c.l.b16 %v1363
      %v1437 = vunpack.c.l.b16 %v1364
      %v1438 = vunpack.c.l.b16 %v1365
      %v1439 = vunpack.c.l.b16 %v1366
      %v1440 = vunpack.c.l.b16 %v1367
      %v1441 = vunpack.c.l.b16 %v1368
      %v1442 = vpack.c.b16 %v1411, %v1410
      %v1443 = vpack.c.b16 %v1413, %v1412
      %v1444 = vpack.c.b16 %v1415, %v1414
      %v1445 = vpack.c.b16 %v1417, %v1416
      %v1446 = vpack.c.b16 %v1419, %v1418
      %v1447 = vpack.c.b16 %v1421, %v1420
      %v1448 = vpack.c.b16 %v1423, %v1422
      %v1449 = vpack.c.b16 %v1425, %v1424
      %v1450 = vpack.c.b16 %v1427, %v1426
      %v1451 = vpack.c.b16 %v1429, %v1428
      %v1452 = vpack.c.b16 %v1431, %v1430
      %v1453 = vpack.c.b16 %v1433, %v1432
      %v1454 = vpack.c.b16 %v1435, %v1434
      %v1455 = vpack.c.b16 %v1437, %v1436
      %v1456 = vpack.c.b16 %v1439, %v1438
      %v1457 = vpack.c.b16 %v1441, %v1440
      %1474 = vmatprep.subr.bf16.mxu0 0
      %1475 = vmatpush1.bf16.msra.mxu0 %v1449
      %1476 = vmatprep.subr.bf16.mxu0 0
      %1477 = vmatpush1.bf16.msra.mxu0 %v1448
      %1478 = vmatprep.subr.bf16.mxu0 0
      %1479 = vmatpush1.bf16.msra.mxu0 %v1447
      %1480 = vmatprep.subr.bf16.mxu0 0
      %1481 = vmatpush1.bf16.msra.mxu0 %v1446
      %1482 = vmatprep.subr.bf16.mxu0 0
      %1483 = vmatpush1.bf16.msra.mxu0 %v1445
      %1484 = vmatprep.subr.bf16.mxu0 0
      %1485 = vmatpush1.bf16.msra.mxu0 %v1444
      %1486 = vmatprep.subr.bf16.mxu0 0
      %1487 = vmatpush1.bf16.msra.mxu0 %v1443
      %1488 = vmatprep.subr.bf16.mxu0 0
      %1489 = vmatpush1.bf16.msra.mxu0 %v1442
      %1490 = vmatprep.subr.bf16.mxu0 0
      %1491 = vmatpush2.bf16.msra.mxu0 %v1457
      %1492 = vmatprep.subr.bf16.mxu0 0
      %1493 = vmatpush2.bf16.msra.mxu0 %v1456
      %1494 = vmatprep.subr.bf16.mxu0 0
      %1495 = vmatpush2.bf16.msra.mxu0 %v1455
      %1496 = vmatprep.subr.bf16.mxu0 0
      %1497 = vmatpush2.bf16.msra.mxu0 %v1454
      %1498 = vmatprep.subr.bf16.mxu0 0
      %1499 = vmatpush2.bf16.msra.mxu0 %v1453
      %1500 = vmatprep.subr.bf16.mxu0 0
      %1501 = vmatpush2.bf16.msra.mxu0 %v1452
      %1502 = vmatprep.subr.bf16.mxu0 0
      %1503 = vmatpush2.bf16.msra.mxu0 %v1451
      %1504 = vmatprep.subr.bf16.mxu0 0
      %1505 = vmatpush2.bf16.msra.mxu0 %v1450
      %1506 = vmatprep.mubr.bf16.mxu0 %v1370
      %1507 = vmatmul.mubr.bf16.gmra.mxu0 %v1369
      %v1508 = vpop.f32.mrf.mxu0
      %v1509 = vadd.f32 %v1376, %v1508
      %v1510 = vpop.f32.mrf.mxu0
      %v1511 = vpop.f32.mrf.mxu0
      %v1512 = vpop.f32.mrf.mxu0
      %1513 = vdwg.mxu0
      %v1514 = vadd.f32 %v1108, %v1509
      %1515 = vst.msk [vmem:[%s435] sm:$0xff] %vm440, %v1514
      %p1516 = scmp.lt.s32.totalorder %s24, 1
      %s1517 = scalar_select %p1516, %s24, 1
      %s1518 = smul.addr %s1517, 8
      %s1519 = scalar_lea.vmem %s13, %s1518
      // Predicated region
      $region73: #{_lambda_.3} parent=71 // pred_check
        %p1520 = pneg %p320
      $region74: #{_lambda_.3} parent=71 // pred_check_branch
        %1522 = sbr.rel (%p1520) target = $region76
      $region75: #{_lambda_.3} parent=71 // pred_region
        _
      $region76: #{_lambda_.3} parent=71 // pred_fallthru
        _
    $region72: #{_lambda_.3} parent=5 // pred_fallthru
      _
    %p1523 = scmp.le.s32.totalorder 2, %s19
    // Predicated region
    $region77: #{_lambda_.3} parent=5 // pred_check
      %p1524 = pneg %p1523
    $region78: #{_lambda_.3} parent=5 // pred_check_branch
      %1526 = sbr.rel (%p1524) target = $region80
    $region79: #{_lambda_.3} parent=5 // pred_region
      %s1527 = ssub.s32 %s19, 2
      // Predicated region
      $region81: #{_lambda_.3} parent=79 // pred_check
        %p1528 = pneg %p326
      $region82: #{_lambda_.3} parent=79 // pred_check_branch
        %1530 = sbr.rel (%p1528) target = $region84
      $region83: #{_lambda_.3} parent=79 // pred_region
        %p1531 = scmp.lt.s32.totalorder %s25, 1
        %s1532 = scalar_select %p1531, %s25, 1
        %s1533 = smul.addr %s1532, 8
        %s1534 = scalar_lea.vmem %s13, %s1533
      $region84: #{_lambda_.3} parent=79 // pred_fallthru
        _
    $region80: #{_lambda_.3} parent=5 // pred_fallthru
      _
  $region6: #{_lambda_.3} parent=0 // loop_footer
    %s23 = sadd.s32 1, %s19
  $region7: #{_lambda_.3} parent=0 // loop_footer_branch
    %18 = sbr.rel target = $region3
  $region8: #{_lambda_.3} parent=0 // loop_exit
    _

</llo_original>
